<compile_context>
chip_gen: v6e
topology: v6e:2x2x1
jax: 0.10.0
libtpu: 0.0.40
codegen_flags: <defaults>
</compile_context>

<pallas_src>
import jax
import jax.numpy as jnp
from jax.experimental import pallas as pl
from jax.experimental.pallas import tpu as pltpu

# ----- model hyperparameters (small, consistent with the module) -----
EMBED = 32
HEADS = 4
HEAD_DIM = EMBED // HEADS
EXPANSION = 4
HIDDEN = EMBED * EXPANSION
SEQ = 8
BATCH = 2
EPS = 1e-5            # nn.LayerNorm default
NEG_INF = -1e12       # matches masked_fill value in the PyTorch module


def _layernorm(x, gamma, beta):
    mu = jnp.mean(x, axis=-1, keepdims=True)
    var = jnp.mean((x - mu) ** 2, axis=-1, keepdims=True)
    return (x - mu) * jax.lax.rsqrt(var + EPS) * gamma + beta


def transformer_block_kernel(
    q_ref, k_ref, v_ref, bias_ref,             # (NS,E) x3, (NS,NS) additive bias
    wv_ref, wk_ref, wq_ref,                    # block-diag per-head projections (E,E)
    wo_ref, bo_ref,                            # fc_out (E,E), (1,E)
    g1_ref, b1_ref,                            # norm1 gamma/beta (1,E)
    w1_ref, bf1_ref,                           # ffn layer 1 (E,HIDDEN), (1,HIDDEN)
    w2_ref, bf2_ref,                           # ffn layer 2 (HIDDEN,E), (1,E)
    g2_ref, b2_ref,                            # norm2 gamma/beta (1,E)
    out_ref,                                   # (NS,E)
):
    q = q_ref[...]            # (NS, E) f32; also the residual ("query")
    k = k_ref[...]
    v = v_ref[...]
    bias = bias_ref[...]      # (NS, NS) f32: 0 where attended, -1e12 otherwise

    # Per-head value/key/query projections. The PyTorch module applies the SAME
    # (head_dim x head_dim) Linear to every head == a single (E,E) block-diagonal
    # matmul (built in the wrapper). 1/sqrt(E) folded into q once.
    inv_scale = jnp.float32(1.0 / (EMBED ** 0.5))
    qp = jnp.dot(q, wq_ref[...], preferred_element_type=jnp.float32) * inv_scale
    kp = jnp.dot(k, wk_ref[...], preferred_element_type=jnp.float32)
    vp = jnp.dot(v, wv_ref[...], preferred_element_type=jnp.float32)

    # lane ids for per-head lane masking (no 8-wide lane slices, no concat)
    lane = jax.lax.broadcasted_iota(jnp.int32, (1, EMBED), 1)

    dims = (((1,), (1,)), ((), ()))            # contract last axes of both operands
    ctx = jnp.zeros_like(qp)                   # accumulates the per-head outputs
    for h in range(HEADS):                     # static unroll, HEADS is small
        hm = jnp.where(
            (lane >= h * HEAD_DIM) & (lane < (h + 1) * HEAD_DIM),
            jnp.float32(1.0), jnp.float32(0.0))
        # (qp*hm) zeros other heads' lanes, so contracting over all E lanes
        # equals qh @ kh^T; no explicit transpose needed.
        energy = jax.lax.dot_general(qp * hm, kp, dims,
                                     preferred_element_type=jnp.float32)
        logits = energy + bias
        m = jnp.max(logits, axis=-1, keepdims=True)
        p = jnp.exp(logits - m)
        attn = p * pl.reciprocal(jnp.sum(p, axis=-1, keepdims=True), approx=True)
        # (attn @ (vp*hm)) is nonzero only on head h's lanes -> summing over h
        # reproduces the head concat with no lane shuffles.
        ctx = ctx + jnp.dot(attn, vp * hm, preferred_element_type=jnp.float32)

    attn_out = jnp.dot(ctx, wo_ref[...], preferred_element_type=jnp.float32) + bo_ref[...]

    # residual + LayerNorm 1
    # TODO(synk): nn.Dropout (training mode) has no clean deterministic Pallas
    # equivalent here; implemented as identity (eval semantics).
    x = _layernorm(attn_out + q, g1_ref[...], b1_ref[...])

    # feed-forward: Linear -> ReLU -> Linear
    h1 = jnp.dot(x, w1_ref[...], preferred_element_type=jnp.float32) + bf1_ref[...]
    h1 = jnp.maximum(h1, 0.0)
    ff = jnp.dot(h1, w2_ref[...], preferred_element_type=jnp.float32) + bf2_ref[...]

    # residual + LayerNorm 2
    out_ref[...] = _layernorm(ff + x, g2_ref[...], b2_ref[...]).astype(out_ref.dtype)


def _build_bias(mask):
    """(N,S,S) 0/1 mask -> (N*S, N*S) additive f32 bias, block-diagonal over batch."""
    N, S, _ = mask.shape
    big = jnp.zeros((N, S, N, S), jnp.float32)
    big = big.at[jnp.arange(N), :, jnp.arange(N), :].set(mask.astype(jnp.float32))
    big = big.reshape(N * S, N * S)
    return jnp.where(big != 0, jnp.float32(0.0), jnp.float32(NEG_INF))


def transformer_block(value, key, query, mask, params):
    N, S, E = query.shape
    NS = N * S

    q2 = query.reshape(NS, E)
    k2 = key.reshape(NS, E)
    v2 = value.reshape(NS, E)
    bias = _build_bias(mask)

    def full(shape):
        return pl.BlockSpec(shape, lambda i: (0,) * len(shape))

    in_specs = [
        full((NS, E)), full((NS, E)), full((NS, E)),   # q, k, v
        full((NS, NS)),                                # additive bias
        full((E, E)), full((E, E)), full((E, E)),      # wv, wk, wq (block-diag)
        full((E, E)), full((1, E)),                    # wo, bo
        full((1, E)), full((1, E)),                    # gamma1, beta1
        full((E, HIDDEN)), full((1, HIDDEN)),          # w1, b1
        full((HIDDEN, E)), full((1, E)),               # w2, b2
        full((1, E)), full((1, E)),                    # gamma2, beta2
    ]

    out = pl.pallas_call(
        transformer_block_kernel,
        out_shape=jax.ShapeDtypeStruct((NS, E), jnp.float32),
        grid_spec=pltpu.PrefetchScalarGridSpec(
            num_scalar_prefetch=0,
            grid=(1,),                                  # single invocation (batch collapsed)
            in_specs=in_specs,
            out_specs=full((NS, E)),
        ),
        compiler_params=pltpu.CompilerParams(
            dimension_semantics=("arbitrary",)),        # no megacore split at this size
    )(q2, k2, v2, bias, *params)

    return out.reshape(N, S, E)


def init_params(rng):
    """Deterministic parameter init. Linear weights follow PyTorch convention
    W[out, in]; we pass W.T so the kernel computes x @ W.T."""
    ks = jax.random.split(rng, 10)
    scale = 0.1

    wv = jax.random.normal(ks[0], (HEAD_DIM, HEAD_DIM), jnp.float32) * scale
    wk = jax.random.normal(ks[1], (HEAD_DIM, HEAD_DIM), jnp.float32) * scale
    wq = jax.random.normal(ks[2], (HEAD_DIM, HEAD_DIM), jnp.float32) * scale
    # shared per-head Linear -> block-diagonal (E, E) matrices (x @ kron(I, W.T))
    eye_h = jnp.eye(HEADS, dtype=jnp.float32)
    wv_bd = jnp.kron(eye_h, wv.T)
    wk_bd = jnp.kron(eye_h, wk.T)
    wq_bd = jnp.kron(eye_h, wq.T)

    wo = jax.random.normal(ks[3], (EMBED, EMBED), jnp.float32) * scale
    bo = jax.random.normal(ks[4], (EMBED,), jnp.float32) * scale

    gamma1 = jnp.ones((EMBED,), jnp.float32)
    beta1 = jnp.zeros((EMBED,), jnp.float32)
    gamma2 = jnp.ones((EMBED,), jnp.float32)
    beta2 = jnp.zeros((EMBED,), jnp.float32)

    w1 = jax.random.normal(ks[5], (HIDDEN, EMBED), jnp.float32) * scale
    b1 = jax.random.normal(ks[6], (HIDDEN,), jnp.float32) * scale
    w2 = jax.random.normal(ks[7], (EMBED, HIDDEN), jnp.float32) * scale
    b2 = jax.random.normal(ks[8], (EMBED,), jnp.float32) * scale

    params = (
        wv_bd, wk_bd, wq_bd,
        wo.T, bo.reshape(1, EMBED),
        gamma1.reshape(1, EMBED), beta1.reshape(1, EMBED),
        w1.T, b1.reshape(1, HIDDEN),
        w2.T, b2.reshape(1, EMBED),
        gamma2.reshape(1, EMBED), beta2.reshape(1, EMBED),
    )
    return params


def reference_forward(value, key, query, mask, params):
    """Pure-JAX reference mirroring the PyTorch forward (eval mode), per-batch."""
    (wv_bd, wk_bd, wq_bd, wo_t, bo, g1, b1, w1_t, bf1, w2_t, bf2, g2, b2) = params
    N, S, E = query.shape
    vp = value @ wv_bd
    kp = key @ wk_bd
    qp = query @ wq_bd
    vh = vp.reshape(N, S, HEADS, HEAD_DIM)
    kh = kp.reshape(N, S, HEADS, HEAD_DIM)
    qh = qp.reshape(N, S, HEADS, HEAD_DIM)
    energy = jnp.einsum("nqhd,nkhd->nhqk", qh, kh)
    energy = jnp.where(mask[:, None, :, :] == 0, NEG_INF, energy)
    attn = jax.nn.softmax(energy / (EMBED ** 0.5), axis=3)
    out = jnp.einsum("nhql,nlhd->nqhd", attn, vh).reshape(N, S, E)
    attn_out = out @ wo_t + bo[0]

    def ln(x, g, b):
        mu = jnp.mean(x, axis=-1, keepdims=True)
        var = jnp.mean((x - mu) ** 2, axis=-1, keepdims=True)
        return (x - mu) / jnp.sqrt(var + EPS) * g[0] + b[0]

    x = ln(attn_out + query, g1, b1)
    ff = jnp.maximum(x @ w1_t + bf1[0], 0.0) @ w2_t + bf2[0]
    return ln(ff + x, g2, b2)


if __name__ == "__main__":
    root = jax.random.PRNGKey(0)
    k_in, k_par = jax.random.split(root)
    kv, kk, kq = jax.random.split(k_in, 3)

    value = jax.random.normal(kv, (BATCH, SEQ, EMBED), jnp.float32)
    key = jax.random.normal(kk, (BATCH, SEQ, EMBED), jnp.float32)
    query = jax.random.normal(kq, (BATCH, SEQ, EMBED), jnp.float32)
    # causal mask, broadcast over heads: (N, S, S)
    mask = jnp.tril(jnp.ones((SEQ, SEQ), jnp.int32))[None].repeat(BATCH, axis=0)

    params = init_params(k_par)

    out = transformer_block(value, key, query, mask, params)
    out = jax.block_until_ready(out)

    ref = reference_forward(value, key, query, mask, params)
    assert out.shape == (BATCH, SEQ, EMBED)
    # tolerance relaxed slightly vs 1e-4 because the softmax denominator uses the
    # EUP approximate reciprocal (pl.reciprocal(approx=True)).
    assert jnp.allclose(out, ref, atol=1e-3, rtol=1e-3), "mismatch vs JAX reference"

    print("KERNEL_OK")
</pallas_src>

<mosaic_0001>
module attributes {stable_mosaic.version = 11 : i64} {
  func.func @transformer_block_kernel(%arg0: i32, %arg1: memref<16x32xf32, #tpu.memory_space<vmem>>, %arg2: memref<16x32xf32, #tpu.memory_space<vmem>>, %arg3: memref<16x32xf32, #tpu.memory_space<vmem>>, %arg4: memref<16x16xf32, #tpu.memory_space<vmem>>, %arg5: memref<32x32xf32, #tpu.memory_space<vmem>>, %arg6: memref<32x32xf32, #tpu.memory_space<vmem>>, %arg7: memref<32x32xf32, #tpu.memory_space<vmem>>, %arg8: memref<32x32xf32, #tpu.memory_space<vmem>>, %arg9: memref<1x32xf32, #tpu.memory_space<vmem>>, %arg10: memref<1x32xf32, #tpu.memory_space<vmem>>, %arg11: memref<1x32xf32, #tpu.memory_space<vmem>>, %arg12: memref<32x128xf32, #tpu.memory_space<vmem>>, %arg13: memref<1x128xf32, #tpu.memory_space<vmem>>, %arg14: memref<128x32xf32, #tpu.memory_space<vmem>>, %arg15: memref<1x32xf32, #tpu.memory_space<vmem>>, %arg16: memref<1x32xf32, #tpu.memory_space<vmem>>, %arg17: memref<1x32xf32, #tpu.memory_space<vmem>>, %arg18: memref<16x32xf32, #tpu.memory_space<vmem>>) attributes {dimension_semantics = [#tpu.dimension_semantics<arbitrary>], iteration_bounds = array<i64: 1>, scalar_prefetch = 0 : i64, scratch_operands = 0 : i64, tpu.core_type = #tpu.core_type<tc>, window_params = [{pipeline_mode = #tpu.pipeline_mode<synchronous>, transform_indices = @transform_0, window_bounds = array<i64: 16, 32>}, {pipeline_mode = #tpu.pipeline_mode<synchronous>, transform_indices = @transform_1, window_bounds = array<i64: 16, 32>}, {pipeline_mode = #tpu.pipeline_mode<synchronous>, transform_indices = @transform_2, window_bounds = array<i64: 16, 32>}, {pipeline_mode = #tpu.pipeline_mode<synchronous>, transform_indices = @transform_3, window_bounds = array<i64: 16, 16>}, {pipeline_mode = #tpu.pipeline_mode<synchronous>, transform_indices = @transform_4, window_bounds = array<i64: 32, 32>}, {pipeline_mode = #tpu.pipeline_mode<synchronous>, transform_indices = @transform_5, window_bounds = array<i64: 32, 32>}, {pipeline_mode = #tpu.pipeline_mode<synchronous>, transform_indices = @transform_6, window_bounds = array<i64: 32, 32>}, {pipeline_mode = #tpu.pipeline_mode<synchronous>, transform_indices = @transform_7, window_bounds = array<i64: 32, 32>}, {pipeline_mode = #tpu.pipeline_mode<synchronous>, transform_indices = @transform_8, window_bounds = array<i64: 1, 32>}, {pipeline_mode = #tpu.pipeline_mode<synchronous>, transform_indices = @transform_9, window_bounds = array<i64: 1, 32>}, {pipeline_mode = #tpu.pipeline_mode<synchronous>, transform_indices = @transform_10, window_bounds = array<i64: 1, 32>}, {pipeline_mode = #tpu.pipeline_mode<synchronous>, transform_indices = @transform_11, window_bounds = array<i64: 32, 128>}, {pipeline_mode = #tpu.pipeline_mode<synchronous>, transform_indices = @transform_12, window_bounds = array<i64: 1, 128>}, {pipeline_mode = #tpu.pipeline_mode<synchronous>, transform_indices = @transform_13, window_bounds = array<i64: 128, 32>}, {pipeline_mode = #tpu.pipeline_mode<synchronous>, transform_indices = @transform_14, window_bounds = array<i64: 1, 32>}, {pipeline_mode = #tpu.pipeline_mode<synchronous>, transform_indices = @transform_15, window_bounds = array<i64: 1, 32>}, {pipeline_mode = #tpu.pipeline_mode<synchronous>, transform_indices = @transform_16, window_bounds = array<i64: 1, 32>}, {pipeline_mode = #tpu.pipeline_mode<synchronous>, transform_indices = @transform_17, window_bounds = array<i64: 16, 32>}]} {
    %c0 = arith.constant 0 : index
    %c0_0 = arith.constant 0 : index
    %0 = vector.load %arg1[%c0, %c0_0] : memref<16x32xf32, #tpu.memory_space<vmem>>, vector<16x32xf32>
    %c0_1 = arith.constant 0 : index
    %c0_2 = arith.constant 0 : index
    %1 = vector.load %arg2[%c0_1, %c0_2] : memref<16x32xf32, #tpu.memory_space<vmem>>, vector<16x32xf32>
    %c0_3 = arith.constant 0 : index
    %c0_4 = arith.constant 0 : index
    %2 = vector.load %arg3[%c0_3, %c0_4] : memref<16x32xf32, #tpu.memory_space<vmem>>, vector<16x32xf32>
    %c0_5 = arith.constant 0 : index
    %c0_6 = arith.constant 0 : index
    %3 = vector.load %arg4[%c0_5, %c0_6] : memref<16x16xf32, #tpu.memory_space<vmem>>, vector<16x16xf32>
    %c0_7 = arith.constant 0 : index
    %c0_8 = arith.constant 0 : index
    %4 = vector.load %arg7[%c0_7, %c0_8] : memref<32x32xf32, #tpu.memory_space<vmem>>, vector<32x32xf32>
    %cst = arith.constant dense<0.000000e+00> : vector<16x32xf32>
    %5 = tpu.matmul %0, %4, %cst {dimension_numbers = #tpu.dot_dimension_numbers<[1], [0], [0], [1], [0, 0, 1, 1], [], []>} : vector<16x32xf32>, vector<32x32xf32>, vector<16x32xf32> -> vector<16x32xf32>
    %cst_9 = arith.constant 0.176776692 : f32
    %6 = vector.broadcast %cst_9 : f32 to vector<16x32xf32>
    %7 = arith.mulf %5, %6 : vector<16x32xf32>
    %c0_10 = arith.constant 0 : index
    %c0_11 = arith.constant 0 : index
    %8 = vector.load %arg6[%c0_10, %c0_11] : memref<32x32xf32, #tpu.memory_space<vmem>>, vector<32x32xf32>
    %cst_12 = arith.constant dense<0.000000e+00> : vector<16x32xf32>
    %9 = tpu.matmul %1, %8, %cst_12 {dimension_numbers = #tpu.dot_dimension_numbers<[1], [0], [0], [1], [0, 0, 1, 1], [], []>} : vector<16x32xf32>, vector<32x32xf32>, vector<16x32xf32> -> vector<16x32xf32>
    %c0_13 = arith.constant 0 : index
    %c0_14 = arith.constant 0 : index
    %10 = vector.load %arg5[%c0_13, %c0_14] : memref<32x32xf32, #tpu.memory_space<vmem>>, vector<32x32xf32>
    %cst_15 = arith.constant dense<0.000000e+00> : vector<16x32xf32>
    %11 = tpu.matmul %2, %10, %cst_15 {dimension_numbers = #tpu.dot_dimension_numbers<[1], [0], [0], [1], [0, 0, 1, 1], [], []>} : vector<16x32xf32>, vector<32x32xf32>, vector<16x32xf32> -> vector<16x32xf32>
    %12 = tpu.iota {dimensions = array<i32: 1>} : vector<1x32xi32>
    %cst_16 = arith.constant 0.000000e+00 : f32
    %13 = vector.broadcast %cst_16 : f32 to vector<16x32xf32>
    %c0_i32 = arith.constant 0 : i32
    %14 = vector.broadcast %c0_i32 : i32 to vector<1x32xi32>
    %15 = arith.cmpi sge, %12, %14 : vector<1x32xi32>
    %c8_i32 = arith.constant 8 : i32
    %16 = vector.broadcast %c8_i32 : i32 to vector<1x32xi32>
    %17 = arith.cmpi slt, %12, %16 : vector<1x32xi32>
    %18 = arith.andi %15, %17 : vector<1x32xi1>
    %cst_17 = arith.constant 1.000000e+00 : f32
    %cst_18 = arith.constant 0.000000e+00 : f32
    %19 = vector.broadcast %cst_17 : f32 to vector<1x32xf32>
    %20 = vector.broadcast %cst_18 : f32 to vector<1x32xf32>
    %21 = arith.select %18, %19, %20 : vector<1x32xi1>, vector<1x32xf32>
    %22 = vector.broadcast %21 : vector<1x32xf32> to vector<16x32xf32>
    %23 = arith.mulf %7, %22 : vector<16x32xf32>
    %cst_19 = arith.constant dense<0.000000e+00> : vector<16x16xf32>
    %24 = tpu.matmul %23, %9, %cst_19 {dimension_numbers = #tpu.dot_dimension_numbers<[1], [1], [0], [0], [0, 0, 1, 0], [], []>} : vector<16x32xf32>, vector<16x32xf32>, vector<16x16xf32> -> vector<16x16xf32>
    %25 = arith.addf %24, %3 : vector<16x16xf32>
    %cst_20 = arith.constant dense<0xFF800000> : vector<16xf32>
    %26 = vector.multi_reduction <maximumf>, %25, %cst_20 [1] : vector<16x16xf32> to vector<16xf32>
    %27 = vector.shape_cast %26 : vector<16xf32> to vector<16x1xf32>
    %28 = vector.broadcast %27 : vector<16x1xf32> to vector<16x16xf32>
    %29 = arith.subf %25, %28 : vector<16x16xf32>
    %30 = math.exp %29 : vector<16x16xf32>
    %cst_21 = arith.constant dense<0.000000e+00> : vector<16xf32>
    %31 = vector.multi_reduction <add>, %30, %cst_21 [1] : vector<16x16xf32> to vector<16xf32>
    %32 = vector.shape_cast %31 : vector<16xf32> to vector<16x1xf32>
    %33 = tpu.reciprocal %32 {approx = true} : vector<16x1xf32> -> vector<16x1xf32>
    %34 = vector.broadcast %33 : vector<16x1xf32> to vector<16x16xf32>
    %35 = arith.mulf %30, %34 : vector<16x16xf32>
    %36 = vector.broadcast %21 : vector<1x32xf32> to vector<16x32xf32>
    %37 = arith.mulf %11, %36 : vector<16x32xf32>
    %cst_22 = arith.constant dense<0.000000e+00> : vector<16x32xf32>
    %38 = tpu.matmul %35, %37, %cst_22 {dimension_numbers = #tpu.dot_dimension_numbers<[1], [0], [0], [1], [0, 0, 1, 1], [], []>} : vector<16x16xf32>, vector<16x32xf32>, vector<16x32xf32> -> vector<16x32xf32>
    %39 = arith.addf %13, %38 : vector<16x32xf32>
    %c8_i32_23 = arith.constant 8 : i32
    %40 = vector.broadcast %c8_i32_23 : i32 to vector<1x32xi32>
    %41 = arith.cmpi sge, %12, %40 : vector<1x32xi32>
    %c16_i32 = arith.constant 16 : i32
    %42 = vector.broadcast %c16_i32 : i32 to vector<1x32xi32>
    %43 = arith.cmpi slt, %12, %42 : vector<1x32xi32>
    %44 = arith.andi %41, %43 : vector<1x32xi1>
    %cst_24 = arith.constant 1.000000e+00 : f32
    %cst_25 = arith.constant 0.000000e+00 : f32
    %45 = vector.broadcast %cst_24 : f32 to vector<1x32xf32>
    %46 = vector.broadcast %cst_25 : f32 to vector<1x32xf32>
    %47 = arith.select %44, %45, %46 : vector<1x32xi1>, vector<1x32xf32>
    %48 = vector.broadcast %47 : vector<1x32xf32> to vector<16x32xf32>
    %49 = arith.mulf %7, %48 : vector<16x32xf32>
    %cst_26 = arith.constant dense<0.000000e+00> : vector<16x16xf32>
    %50 = tpu.matmul %49, %9, %cst_26 {dimension_numbers = #tpu.dot_dimension_numbers<[1], [1], [0], [0], [0, 0, 1, 0], [], []>} : vector<16x32xf32>, vector<16x32xf32>, vector<16x16xf32> -> vector<16x16xf32>
    %51 = arith.addf %50, %3 : vector<16x16xf32>
    %cst_27 = arith.constant dense<0xFF800000> : vector<16xf32>
    %52 = vector.multi_reduction <maximumf>, %51, %cst_27 [1] : vector<16x16xf32> to vector<16xf32>
    %53 = vector.shape_cast %52 : vector<16xf32> to vector<16x1xf32>
    %54 = vector.broadcast %53 : vector<16x1xf32> to vector<16x16xf32>
    %55 = arith.subf %51, %54 : vector<16x16xf32>
    %56 = math.exp %55 : vector<16x16xf32>
    %cst_28 = arith.constant dense<0.000000e+00> : vector<16xf32>
    %57 = vector.multi_reduction <add>, %56, %cst_28 [1] : vector<16x16xf32> to vector<16xf32>
    %58 = vector.shape_cast %57 : vector<16xf32> to vector<16x1xf32>
    %59 = tpu.reciprocal %58 {approx = true} : vector<16x1xf32> -> vector<16x1xf32>
    %60 = vector.broadcast %59 : vector<16x1xf32> to vector<16x16xf32>
    %61 = arith.mulf %56, %60 : vector<16x16xf32>
    %62 = vector.broadcast %47 : vector<1x32xf32> to vector<16x32xf32>
    %63 = arith.mulf %11, %62 : vector<16x32xf32>
    %cst_29 = arith.constant dense<0.000000e+00> : vector<16x32xf32>
    %64 = tpu.matmul %61, %63, %cst_29 {dimension_numbers = #tpu.dot_dimension_numbers<[1], [0], [0], [1], [0, 0, 1, 1], [], []>} : vector<16x16xf32>, vector<16x32xf32>, vector<16x32xf32> -> vector<16x32xf32>
    %65 = arith.addf %39, %64 : vector<16x32xf32>
    %c16_i32_30 = arith.constant 16 : i32
    %66 = vector.broadcast %c16_i32_30 : i32 to vector<1x32xi32>
    %67 = arith.cmpi sge, %12, %66 : vector<1x32xi32>
    %c24_i32 = arith.constant 24 : i32
    %68 = vector.broadcast %c24_i32 : i32 to vector<1x32xi32>
    %69 = arith.cmpi slt, %12, %68 : vector<1x32xi32>
    %70 = arith.andi %67, %69 : vector<1x32xi1>
    %cst_31 = arith.constant 1.000000e+00 : f32
    %cst_32 = arith.constant 0.000000e+00 : f32
    %71 = vector.broadcast %cst_31 : f32 to vector<1x32xf32>
    %72 = vector.broadcast %cst_32 : f32 to vector<1x32xf32>
    %73 = arith.select %70, %71, %72 : vector<1x32xi1>, vector<1x32xf32>
    %74 = vector.broadcast %73 : vector<1x32xf32> to vector<16x32xf32>
    %75 = arith.mulf %7, %74 : vector<16x32xf32>
    %cst_33 = arith.constant dense<0.000000e+00> : vector<16x16xf32>
    %76 = tpu.matmul %75, %9, %cst_33 {dimension_numbers = #tpu.dot_dimension_numbers<[1], [1], [0], [0], [0, 0, 1, 0], [], []>} : vector<16x32xf32>, vector<16x32xf32>, vector<16x16xf32> -> vector<16x16xf32>
    %77 = arith.addf %76, %3 : vector<16x16xf32>
    %cst_34 = arith.constant dense<0xFF800000> : vector<16xf32>
    %78 = vector.multi_reduction <maximumf>, %77, %cst_34 [1] : vector<16x16xf32> to vector<16xf32>
    %79 = vector.shape_cast %78 : vector<16xf32> to vector<16x1xf32>
    %80 = vector.broadcast %79 : vector<16x1xf32> to vector<16x16xf32>
    %81 = arith.subf %77, %80 : vector<16x16xf32>
    %82 = math.exp %81 : vector<16x16xf32>
    %cst_35 = arith.constant dense<0.000000e+00> : vector<16xf32>
    %83 = vector.multi_reduction <add>, %82, %cst_35 [1] : vector<16x16xf32> to vector<16xf32>
    %84 = vector.shape_cast %83 : vector<16xf32> to vector<16x1xf32>
    %85 = tpu.reciprocal %84 {approx = true} : vector<16x1xf32> -> vector<16x1xf32>
    %86 = vector.broadcast %85 : vector<16x1xf32> to vector<16x16xf32>
    %87 = arith.mulf %82, %86 : vector<16x16xf32>
    %88 = vector.broadcast %73 : vector<1x32xf32> to vector<16x32xf32>
    %89 = arith.mulf %11, %88 : vector<16x32xf32>
    %cst_36 = arith.constant dense<0.000000e+00> : vector<16x32xf32>
    %90 = tpu.matmul %87, %89, %cst_36 {dimension_numbers = #tpu.dot_dimension_numbers<[1], [0], [0], [1], [0, 0, 1, 1], [], []>} : vector<16x16xf32>, vector<16x32xf32>, vector<16x32xf32> -> vector<16x32xf32>
    %91 = arith.addf %65, %90 : vector<16x32xf32>
    %c24_i32_37 = arith.constant 24 : i32
    %92 = vector.broadcast %c24_i32_37 : i32 to vector<1x32xi32>
    %93 = arith.cmpi sge, %12, %92 : vector<1x32xi32>
    %c32_i32 = arith.constant 32 : i32
    %94 = vector.broadcast %c32_i32 : i32 to vector<1x32xi32>
    %95 = arith.cmpi slt, %12, %94 : vector<1x32xi32>
    %96 = arith.andi %93, %95 : vector<1x32xi1>
    %cst_38 = arith.constant 1.000000e+00 : f32
    %cst_39 = arith.constant 0.000000e+00 : f32
    %97 = vector.broadcast %cst_38 : f32 to vector<1x32xf32>
    %98 = vector.broadcast %cst_39 : f32 to vector<1x32xf32>
    %99 = arith.select %96, %97, %98 : vector<1x32xi1>, vector<1x32xf32>
    %100 = vector.broadcast %99 : vector<1x32xf32> to vector<16x32xf32>
    %101 = arith.mulf %7, %100 : vector<16x32xf32>
    %cst_40 = arith.constant dense<0.000000e+00> : vector<16x16xf32>
    %102 = tpu.matmul %101, %9, %cst_40 {dimension_numbers = #tpu.dot_dimension_numbers<[1], [1], [0], [0], [0, 0, 1, 0], [], []>} : vector<16x32xf32>, vector<16x32xf32>, vector<16x16xf32> -> vector<16x16xf32>
    %103 = arith.addf %102, %3 : vector<16x16xf32>
    %cst_41 = arith.constant dense<0xFF800000> : vector<16xf32>
    %104 = vector.multi_reduction <maximumf>, %103, %cst_41 [1] : vector<16x16xf32> to vector<16xf32>
    %105 = vector.shape_cast %104 : vector<16xf32> to vector<16x1xf32>
    %106 = vector.broadcast %105 : vector<16x1xf32> to vector<16x16xf32>
    %107 = arith.subf %103, %106 : vector<16x16xf32>
    %108 = math.exp %107 : vector<16x16xf32>
    %cst_42 = arith.constant dense<0.000000e+00> : vector<16xf32>
    %109 = vector.multi_reduction <add>, %108, %cst_42 [1] : vector<16x16xf32> to vector<16xf32>
    %110 = vector.shape_cast %109 : vector<16xf32> to vector<16x1xf32>
    %111 = tpu.reciprocal %110 {approx = true} : vector<16x1xf32> -> vector<16x1xf32>
    %112 = vector.broadcast %111 : vector<16x1xf32> to vector<16x16xf32>
    %113 = arith.mulf %108, %112 : vector<16x16xf32>
    %114 = vector.broadcast %99 : vector<1x32xf32> to vector<16x32xf32>
    %115 = arith.mulf %11, %114 : vector<16x32xf32>
    %cst_43 = arith.constant dense<0.000000e+00> : vector<16x32xf32>
    %116 = tpu.matmul %113, %115, %cst_43 {dimension_numbers = #tpu.dot_dimension_numbers<[1], [0], [0], [1], [0, 0, 1, 1], [], []>} : vector<16x16xf32>, vector<16x32xf32>, vector<16x32xf32> -> vector<16x32xf32>
    %117 = arith.addf %91, %116 : vector<16x32xf32>
    %c0_44 = arith.constant 0 : index
    %c0_45 = arith.constant 0 : index
    %118 = vector.load %arg8[%c0_44, %c0_45] : memref<32x32xf32, #tpu.memory_space<vmem>>, vector<32x32xf32>
    %cst_46 = arith.constant dense<0.000000e+00> : vector<16x32xf32>
    %119 = tpu.matmul %117, %118, %cst_46 {dimension_numbers = #tpu.dot_dimension_numbers<[1], [0], [0], [1], [0, 0, 1, 1], [], []>} : vector<16x32xf32>, vector<32x32xf32>, vector<16x32xf32> -> vector<16x32xf32>
    %c0_47 = arith.constant 0 : index
    %c0_48 = arith.constant 0 : index
    %120 = vector.load %arg9[%c0_47, %c0_48] : memref<1x32xf32, #tpu.memory_space<vmem>>, vector<1x32xf32>
    %121 = vector.broadcast %120 : vector<1x32xf32> to vector<16x32xf32>
    %122 = arith.addf %119, %121 : vector<16x32xf32>
    %123 = arith.addf %122, %0 : vector<16x32xf32>
    %c0_49 = arith.constant 0 : index
    %c0_50 = arith.constant 0 : index
    %124 = vector.load %arg10[%c0_49, %c0_50] : memref<1x32xf32, #tpu.memory_space<vmem>>, vector<1x32xf32>
    %c0_51 = arith.constant 0 : index
    %c0_52 = arith.constant 0 : index
    %125 = vector.load %arg11[%c0_51, %c0_52] : memref<1x32xf32, #tpu.memory_space<vmem>>, vector<1x32xf32>
    %cst_53 = arith.constant dense<0.000000e+00> : vector<16xf32>
    %126 = vector.multi_reduction <add>, %123, %cst_53 [1] : vector<16x32xf32> to vector<16xf32>
    %127 = vector.shape_cast %126 : vector<16xf32> to vector<16x1xf32>
    %cst_54 = arith.constant 3.200000e+01 : f32
    %128 = vector.broadcast %cst_54 : f32 to vector<16x1xf32>
    %129 = arith.divf %127, %128 : vector<16x1xf32>
    %130 = vector.broadcast %129 : vector<16x1xf32> to vector<16x32xf32>
    %131 = arith.subf %123, %130 : vector<16x32xf32>
    %132 = arith.mulf %131, %131 : vector<16x32xf32>
    %cst_55 = arith.constant dense<0.000000e+00> : vector<16xf32>
    %133 = vector.multi_reduction <add>, %132, %cst_55 [1] : vector<16x32xf32> to vector<16xf32>
    %134 = vector.shape_cast %133 : vector<16xf32> to vector<16x1xf32>
    %cst_56 = arith.constant 3.200000e+01 : f32
    %135 = vector.broadcast %cst_56 : f32 to vector<16x1xf32>
    %136 = arith.divf %134, %135 : vector<16x1xf32>
    %137 = vector.broadcast %129 : vector<16x1xf32> to vector<16x32xf32>
    %138 = arith.subf %123, %137 : vector<16x32xf32>
    %cst_57 = arith.constant 9.99999974E-6 : f32
    %139 = vector.broadcast %cst_57 : f32 to vector<16x1xf32>
    %140 = arith.addf %136, %139 : vector<16x1xf32>
    %141 = math.rsqrt %140 : vector<16x1xf32>
    %142 = vector.broadcast %141 : vector<16x1xf32> to vector<16x32xf32>
    %143 = arith.mulf %138, %142 : vector<16x32xf32>
    %144 = vector.broadcast %124 : vector<1x32xf32> to vector<16x32xf32>
    %145 = arith.mulf %143, %144 : vector<16x32xf32>
    %146 = vector.broadcast %125 : vector<1x32xf32> to vector<16x32xf32>
    %147 = arith.addf %145, %146 : vector<16x32xf32>
    %c0_58 = arith.constant 0 : index
    %c0_59 = arith.constant 0 : index
    %148 = vector.load %arg12[%c0_58, %c0_59] : memref<32x128xf32, #tpu.memory_space<vmem>>, vector<32x128xf32>
    %cst_60 = arith.constant dense<0.000000e+00> : vector<16x128xf32>
    %149 = tpu.matmul %147, %148, %cst_60 {dimension_numbers = #tpu.dot_dimension_numbers<[1], [0], [0], [1], [0, 0, 1, 1], [], []>} : vector<16x32xf32>, vector<32x128xf32>, vector<16x128xf32> -> vector<16x128xf32>
    %c0_61 = arith.constant 0 : index
    %c0_62 = arith.constant 0 : index
    %150 = vector.load %arg13[%c0_61, %c0_62] : memref<1x128xf32, #tpu.memory_space<vmem>>, vector<1x128xf32>
    %151 = vector.broadcast %150 : vector<1x128xf32> to vector<16x128xf32>
    %152 = arith.addf %149, %151 : vector<16x128xf32>
    %cst_63 = arith.constant 0.000000e+00 : f32
    %153 = vector.broadcast %cst_63 : f32 to vector<16x128xf32>
    %154 = arith.maximumf %152, %153 : vector<16x128xf32>
    %c0_64 = arith.constant 0 : index
    %c0_65 = arith.constant 0 : index
    %155 = vector.load %arg14[%c0_64, %c0_65] : memref<128x32xf32, #tpu.memory_space<vmem>>, vector<128x32xf32>
    %cst_66 = arith.constant dense<0.000000e+00> : vector<16x32xf32>
    %156 = tpu.matmul %154, %155, %cst_66 {dimension_numbers = #tpu.dot_dimension_numbers<[1], [0], [0], [1], [0, 0, 1, 1], [], []>} : vector<16x128xf32>, vector<128x32xf32>, vector<16x32xf32> -> vector<16x32xf32>
    %c0_67 = arith.constant 0 : index
    %c0_68 = arith.constant 0 : index
    %157 = vector.load %arg15[%c0_67, %c0_68] : memref<1x32xf32, #tpu.memory_space<vmem>>, vector<1x32xf32>
    %158 = vector.broadcast %157 : vector<1x32xf32> to vector<16x32xf32>
    %159 = arith.addf %156, %158 : vector<16x32xf32>
    %160 = arith.addf %159, %147 : vector<16x32xf32>
    %c0_69 = arith.constant 0 : index
    %c0_70 = arith.constant 0 : index
    %161 = vector.load %arg16[%c0_69, %c0_70] : memref<1x32xf32, #tpu.memory_space<vmem>>, vector<1x32xf32>
    %c0_71 = arith.constant 0 : index
    %c0_72 = arith.constant 0 : index
    %162 = vector.load %arg17[%c0_71, %c0_72] : memref<1x32xf32, #tpu.memory_space<vmem>>, vector<1x32xf32>
    %cst_73 = arith.constant dense<0.000000e+00> : vector<16xf32>
    %163 = vector.multi_reduction <add>, %160, %cst_73 [1] : vector<16x32xf32> to vector<16xf32>
    %164 = vector.shape_cast %163 : vector<16xf32> to vector<16x1xf32>
    %cst_74 = arith.constant 3.200000e+01 : f32
    %165 = vector.broadcast %cst_74 : f32 to vector<16x1xf32>
    %166 = arith.divf %164, %165 : vector<16x1xf32>
    %167 = vector.broadcast %166 : vector<16x1xf32> to vector<16x32xf32>
    %168 = arith.subf %160, %167 : vector<16x32xf32>
    %169 = arith.mulf %168, %168 : vector<16x32xf32>
    %cst_75 = arith.constant dense<0.000000e+00> : vector<16xf32>
    %170 = vector.multi_reduction <add>, %169, %cst_75 [1] : vector<16x32xf32> to vector<16xf32>
    %171 = vector.shape_cast %170 : vector<16xf32> to vector<16x1xf32>
    %cst_76 = arith.constant 3.200000e+01 : f32
    %172 = vector.broadcast %cst_76 : f32 to vector<16x1xf32>
    %173 = arith.divf %171, %172 : vector<16x1xf32>
    %174 = vector.broadcast %166 : vector<16x1xf32> to vector<16x32xf32>
    %175 = arith.subf %160, %174 : vector<16x32xf32>
    %cst_77 = arith.constant 9.99999974E-6 : f32
    %176 = vector.broadcast %cst_77 : f32 to vector<16x1xf32>
    %177 = arith.addf %173, %176 : vector<16x1xf32>
    %178 = math.rsqrt %177 : vector<16x1xf32>
    %179 = vector.broadcast %178 : vector<16x1xf32> to vector<16x32xf32>
    %180 = arith.mulf %175, %179 : vector<16x32xf32>
    %181 = vector.broadcast %161 : vector<1x32xf32> to vector<16x32xf32>
    %182 = arith.mulf %180, %181 : vector<16x32xf32>
    %183 = vector.broadcast %162 : vector<1x32xf32> to vector<16x32xf32>
    %184 = arith.addf %182, %183 : vector<16x32xf32>
    %c0_78 = arith.constant 0 : index
    %c0_79 = arith.constant 0 : index
    %185 = vector.load %arg18[%c0_78, %c0_79] : memref<16x32xf32, #tpu.memory_space<vmem>>, vector<16x32xf32>
    tpu.vector_store %arg18[%c0_78, %c0_79], %184 {strides = array<i32>} : memref<16x32xf32, #tpu.memory_space<vmem>>, vector<16x32xf32>,
    return
  }
  func.func @transform_0(%arg0: i32) -> (i32, i32) {
    %c0_i32 = arith.constant 0 : i32
    %c0_i32_0 = arith.constant 0 : i32
    %c0_i32_1 = arith.constant 0 : i32
    return %c0_i32, %c0_i32_0 : i32, i32
  }
  func.func @transform_1(%arg0: i32) -> (i32, i32) {
    %c0_i32 = arith.constant 0 : i32
    %c0_i32_0 = arith.constant 0 : i32
    %c0_i32_1 = arith.constant 0 : i32
    return %c0_i32, %c0_i32_0 : i32, i32
  }
  func.func @transform_2(%arg0: i32) -> (i32, i32) {
    %c0_i32 = arith.constant 0 : i32
    %c0_i32_0 = arith.constant 0 : i32
    %c0_i32_1 = arith.constant 0 : i32
    return %c0_i32, %c0_i32_0 : i32, i32
  }
  func.func @transform_3(%arg0: i32) -> (i32, i32) {
    %c0_i32 = arith.constant 0 : i32
    %c0_i32_0 = arith.constant 0 : i32
    %c0_i32_1 = arith.constant 0 : i32
    return %c0_i32, %c0_i32_0 : i32, i32
  }
  func.func @transform_4(%arg0: i32) -> (i32, i32) {
    %c0_i32 = arith.constant 0 : i32
    %c0_i32_0 = arith.constant 0 : i32
    %c0_i32_1 = arith.constant 0 : i32
    return %c0_i32, %c0_i32_0 : i32, i32
  }
  func.func @transform_5(%arg0: i32) -> (i32, i32) {
    %c0_i32 = arith.constant 0 : i32
    %c0_i32_0 = arith.constant 0 : i32
    %c0_i32_1 = arith.constant 0 : i32
    return %c0_i32, %c0_i32_0 : i32, i32
  }
  func.func @transform_6(%arg0: i32) -> (i32, i32) {
    %c0_i32 = arith.constant 0 : i32
    %c0_i32_0 = arith.constant 0 : i32
    %c0_i32_1 = arith.constant 0 : i32
    return %c0_i32, %c0_i32_0 : i32, i32
  }
  func.func @transform_7(%arg0: i32) -> (i32, i32) {
    %c0_i32 = arith.constant 0 : i32
    %c0_i32_0 = arith.constant 0 : i32
    %c0_i32_1 = arith.constant 0 : i32
    return %c0_i32, %c0_i32_0 : i32, i32
  }
  func.func @transform_8(%arg0: i32) -> (i32, i32) {
    %c0_i32 = arith.constant 0 : i32
    %c0_i32_0 = arith.constant 0 : i32
    %c0_i32_1 = arith.constant 0 : i32
    return %c0_i32, %c0_i32_0 : i32, i32
  }
  func.func @transform_9(%arg0: i32) -> (i32, i32) {
    %c0_i32 = arith.constant 0 : i32
    %c0_i32_0 = arith.constant 0 : i32
    %c0_i32_1 = arith.constant 0 : i32
    return %c0_i32, %c0_i32_0 : i32, i32
  }
  func.func @transform_10(%arg0: i32) -> (i32, i32) {
    %c0_i32 = arith.constant 0 : i32
    %c0_i32_0 = arith.constant 0 : i32
    %c0_i32_1 = arith.constant 0 : i32
    return %c0_i32, %c0_i32_0 : i32, i32
  }
  func.func @transform_11(%arg0: i32) -> (i32, i32) {
    %c0_i32 = arith.constant 0 : i32
    %c0_i32_0 = arith.constant 0 : i32
    %c0_i32_1 = arith.constant 0 : i32
    return %c0_i32, %c0_i32_0 : i32, i32
  }
  func.func @transform_12(%arg0: i32) -> (i32, i32) {
    %c0_i32 = arith.constant 0 : i32
    %c0_i32_0 = arith.constant 0 : i32
    %c0_i32_1 = arith.constant 0 : i32
    return %c0_i32, %c0_i32_0 : i32, i32
  }
  func.func @transform_13(%arg0: i32) -> (i32, i32) {
    %c0_i32 = arith.constant 0 : i32
    %c0_i32_0 = arith.constant 0 : i32
    %c0_i32_1 = arith.constant 0 : i32
    return %c0_i32, %c0_i32_0 : i32, i32
  }
  func.func @transform_14(%arg0: i32) -> (i32, i32) {
    %c0_i32 = arith.constant 0 : i32
    %c0_i32_0 = arith.constant 0 : i32
    %c0_i32_1 = arith.constant 0 : i32
    return %c0_i32, %c0_i32_0 : i32, i32
  }
  func.func @transform_15(%arg0: i32) -> (i32, i32) {
    %c0_i32 = arith.constant 0 : i32
    %c0_i32_0 = arith.constant 0 : i32
    %c0_i32_1 = arith.constant 0 : i32
    return %c0_i32, %c0_i32_0 : i32, i32
  }
  func.func @transform_16(%arg0: i32) -> (i32, i32) {
    %c0_i32 = arith.constant 0 : i32
    %c0_i32_0 = arith.constant 0 : i32
    %c0_i32_1 = arith.constant 0 : i32
    return %c0_i32, %c0_i32_0 : i32, i32
  }
  func.func @transform_17(%arg0: i32) -> (i32, i32) {
    %c0_i32 = arith.constant 0 : i32
    %c0_i32_0 = arith.constant 0 : i32
    %c0_i32_1 = arith.constant 0 : i32
    return %c0_i32, %c0_i32_0 : i32, i32
  }
}

</mosaic_0001>

<llo_original>
// kernel: tpu_custom_call.1
$region0: #{tpu_custom_call.1}
  #allocation0 [shape = 'u32[]', space=smem, size = 0x4, offset = 0x4, fixed_abs, tag = 'smem constant byte address 0x4 - core index']
  #allocation1 [shape = 'u32[144,128]{1,0:T(1,128)}', space=vmem, size = 0x12000, scoped, tag = 'internal scratch']
  %s0 = inlined_call_operand.hbm [shape: f32[16,32], index: 0, kind: input, shape index: {}]
  %s1 = inlined_call_operand.hbm [shape: f32[16,32], index: 1, kind: input, shape index: {}]
  %s2 = inlined_call_operand.hbm [shape: f32[16,32], index: 2, kind: input, shape index: {}]
  %s3 = inlined_call_operand.hbm [shape: f32[16,16], index: 3, kind: input, shape index: {}]
  %s4 = inlined_call_operand.vmem [shape: f32[32,32], index: 4, kind: input, shape index: {}]
  %s5 = inlined_call_operand.vmem [shape: f32[32,32], index: 5, kind: input, shape index: {}]
  %s6 = inlined_call_operand.vmem [shape: f32[32,32], index: 6, kind: input, shape index: {}]
  %s7 = inlined_call_operand.vmem [shape: f32[32,32], index: 7, kind: input, shape index: {}]
  %s8 = inlined_call_operand.vmem [shape: f32[1,32], index: 8, kind: input, shape index: {}]
  %s9 = inlined_call_operand.vmem [shape: f32[1,32], index: 9, kind: input, shape index: {}]
  %s10 = inlined_call_operand.vmem [shape: f32[1,32], index: 10, kind: input, shape index: {}]
  %s11 = inlined_call_operand.vmem [shape: f32[32,128], index: 11, kind: input, shape index: {}]
  %s12 = inlined_call_operand.vmem [shape: f32[1,128], index: 12, kind: input, shape index: {}]
  %s13 = inlined_call_operand.vmem [shape: f32[128,32], index: 13, kind: input, shape index: {}]
  %s14 = inlined_call_operand.vmem [shape: f32[1,32], index: 14, kind: input, shape index: {}]
  %s15 = inlined_call_operand.vmem [shape: f32[1,32], index: 15, kind: input, shape index: {}]
  %s16 = inlined_call_operand.vmem [shape: f32[1,32], index: 16, kind: input, shape index: {}]
  %s17 = inlined_call_operand.hbm [shape: f32[16,32], index: 17, kind: output, shape index: {}]
  %s18 = sld [smem:[#allocation0]]
  $region94: #{tpu_custom_call.1} parent=0
    _
  %s20 = ssub.s32 1, %s18
  %s21 = scalar_select 0, %s20, %s18
  $region1: #{tpu_custom_call.1} parent=0
    #allocation2 [shape = 'u8[8192]{0}', space=vmem, size = 0x2000, scoped, tag = 'input window, operand 0, single buffered']
    #allocation3 [shape = 's32[1]{0}', space=sflag, size = 0x4, scoped, tag = 'scoped memory for tpu_custom_call.1']
    #allocation4 [shape = 's32[1]{0}', space=sflag, size = 0x4, scoped, tag = 'scoped memory for tpu_custom_call.1']
    #allocation5 [shape = 'u8[8192]{0}', space=vmem, size = 0x2000, scoped, tag = 'input window, operand 1, single buffered']
    #allocation6 [shape = 's32[1]{0}', space=sflag, size = 0x4, scoped, tag = 'scoped memory for tpu_custom_call.1']
    #allocation7 [shape = 'u8[8192]{0}', space=vmem, size = 0x2000, scoped, tag = 'input window, operand 2, single buffered']
    #allocation8 [shape = 'u8[8192]{0}', space=vmem, size = 0x2000, scoped, tag = 'input window, operand 3, single buffered']
    #allocation9 [shape = 's32[1]{0}', space=sflag, size = 0x4, scoped, tag = 'scoped memory for tpu_custom_call.1']
    #allocation10 [shape = 'u8[8192]{0}', space=vmem, size = 0x2000, scoped, tag = 'output window, operand 0, single buffered']
    %22 = vsyncpa [#allocation3], 0
    %23 = vsyncpa [#allocation6], 0
    %24 = vsyncpa [#allocation9], 0
    %25 = vsyncpa [#allocation4], 0
    // Predicated region
    $region2: #{tpu_custom_call.1} parent=1 // pred_check
      _
    $region3: #{tpu_custom_call.1} parent=1 // pred_check_branch
      %27 = sbr.rel (0) target = $region5
    $region4: #{tpu_custom_call.1} parent=1 // pred_region
      %s29 = ssub.s32 256, 256
      %30 = vsyncadd [#allocation3], %s29
      %s31 = sshll.u32 [#allocation2], 4
      %s32 = int_to_ptr.vmem [resolvable:$true] %s31
      %37 = dma.hbm_to_vmem [thread:$0]  %s0, 256, %s32, [#allocation3], 128, 128, 8
    $region5: #{tpu_custom_call.1} parent=1 // pred_fallthru
      _
    // Predicated region
    $region6: #{tpu_custom_call.1} parent=1 // pred_check
      _
    $region7: #{tpu_custom_call.1} parent=1 // pred_check_branch
      %39 = sbr.rel (0) target = $region9
    $region8: #{tpu_custom_call.1} parent=1 // pred_region
      %s41 = ssub.s32 256, 256
      %42 = vsyncadd [#allocation6], %s41
      %s43 = sshll.u32 [#allocation5], 4
      %s44 = int_to_ptr.vmem [resolvable:$true] %s43
      %49 = dma.hbm_to_vmem [thread:$0]  %s1, 256, %s44, [#allocation6], 128, 128, 8
    $region9: #{tpu_custom_call.1} parent=1 // pred_fallthru
      _
    // Predicated region
    $region10: #{tpu_custom_call.1} parent=1 // pred_check
      _
    $region11: #{tpu_custom_call.1} parent=1 // pred_check_branch
      %51 = sbr.rel (0) target = $region13
    $region12: #{tpu_custom_call.1} parent=1 // pred_region
      %s53 = ssub.s32 256, 256
      %54 = vsyncadd [#allocation6], %s53
      %s55 = sshll.u32 [#allocation7], 4
      %s56 = int_to_ptr.vmem [resolvable:$true] %s55
      %61 = dma.hbm_to_vmem [thread:$0]  %s2, 256, %s56, [#allocation6], 128, 128, 8
    $region13: #{tpu_custom_call.1} parent=1 // pred_fallthru
      _
    // Predicated region
    $region14: #{tpu_custom_call.1} parent=1 // pred_check
      _
    $region15: #{tpu_custom_call.1} parent=1 // pred_check_branch
      %63 = sbr.rel (0) target = $region17
    $region16: #{tpu_custom_call.1} parent=1 // pred_region
      %s65 = ssub.s32 256, 256
      %66 = vsyncadd [#allocation9], %s65
      %s67 = sshll.u32 [#allocation8], 4
      %s68 = int_to_ptr.vmem [resolvable:$true] %s67
      %73 = dma.hbm_to_vmem [thread:$0]  %s3, 256, %s68, [#allocation9], 128, 128, 8
    $region17: #{tpu_custom_call.1} parent=1 // pred_fallthru
      _
    // Predicated region
    $region18: #{tpu_custom_call.1} parent=1 // pred_check
      _
    $region19: #{tpu_custom_call.1} parent=1 // pred_check_branch
      %75 = sbr.rel (0) target = $region21
    $region20: #{tpu_custom_call.1} parent=1 // pred_region
      _
    $region21: #{tpu_custom_call.1} parent=1 // pred_fallthru
      _
    // Predicated region
    $region22: #{tpu_custom_call.1} parent=1 // pred_check
      _
    $region23: #{tpu_custom_call.1} parent=1 // pred_check_branch
      %77 = sbr.rel (0) target = $region25
    $region24: #{tpu_custom_call.1} parent=1 // pred_region
      _
    $region25: #{tpu_custom_call.1} parent=1 // pred_fallthru
      _
    // Predicated region
    $region26: #{tpu_custom_call.1} parent=1 // pred_check
      _
    $region27: #{tpu_custom_call.1} parent=1 // pred_check_branch
      %79 = sbr.rel (0) target = $region29
    $region28: #{tpu_custom_call.1} parent=1 // pred_region
      _
    $region29: #{tpu_custom_call.1} parent=1 // pred_fallthru
      _
    // Predicated region
    $region30: #{tpu_custom_call.1} parent=1 // pred_check
      _
    $region31: #{tpu_custom_call.1} parent=1 // pred_check_branch
      %81 = sbr.rel (0) target = $region33
    $region32: #{tpu_custom_call.1} parent=1 // pred_region
      _
    $region33: #{tpu_custom_call.1} parent=1 // pred_fallthru
      _
    // Predicated region
    $region34: #{tpu_custom_call.1} parent=1 // pred_check
      _
    $region35: #{tpu_custom_call.1} parent=1 // pred_check_branch
      %83 = sbr.rel (0) target = $region37
    $region36: #{tpu_custom_call.1} parent=1 // pred_region
      _
    $region37: #{tpu_custom_call.1} parent=1 // pred_fallthru
      _
    // Predicated region
    $region38: #{tpu_custom_call.1} parent=1 // pred_check
      _
    $region39: #{tpu_custom_call.1} parent=1 // pred_check_branch
      %85 = sbr.rel (0) target = $region41
    $region40: #{tpu_custom_call.1} parent=1 // pred_region
      _
    $region41: #{tpu_custom_call.1} parent=1 // pred_fallthru
      _
    // Predicated region
    $region42: #{tpu_custom_call.1} parent=1 // pred_check
      _
    $region43: #{tpu_custom_call.1} parent=1 // pred_check_branch
      %87 = sbr.rel (0) target = $region45
    $region44: #{tpu_custom_call.1} parent=1 // pred_region
      _
    $region45: #{tpu_custom_call.1} parent=1 // pred_fallthru
      _
    // Predicated region
    $region46: #{tpu_custom_call.1} parent=1 // pred_check
      _
    $region47: #{tpu_custom_call.1} parent=1 // pred_check_branch
      %89 = sbr.rel (0) target = $region49
    $region48: #{tpu_custom_call.1} parent=1 // pred_region
      _
    $region49: #{tpu_custom_call.1} parent=1 // pred_fallthru
      _
    // Predicated region
    $region50: #{tpu_custom_call.1} parent=1 // pred_check
      _
    $region51: #{tpu_custom_call.1} parent=1 // pred_check_branch
      %91 = sbr.rel (0) target = $region53
    $region52: #{tpu_custom_call.1} parent=1 // pred_region
      _
    $region53: #{tpu_custom_call.1} parent=1 // pred_fallthru
      _
    // Predicated region
    $region54: #{tpu_custom_call.1} parent=1 // pred_check
      _
    $region55: #{tpu_custom_call.1} parent=1 // pred_check_branch
      %93 = sbr.rel (0) target = $region57
    $region56: #{tpu_custom_call.1} parent=1 // pred_region
      _
    $region57: #{tpu_custom_call.1} parent=1 // pred_fallthru
      _
    // Predicated region
    $region58: #{tpu_custom_call.1} parent=1 // pred_check
      _
    $region59: #{tpu_custom_call.1} parent=1 // pred_check_branch
      %95 = sbr.rel (0) target = $region61
    $region60: #{tpu_custom_call.1} parent=1 // pred_region
      _
    $region61: #{tpu_custom_call.1} parent=1 // pred_fallthru
      _
    // Predicated region
    $region62: #{tpu_custom_call.1} parent=1 // pred_check
      _
    $region63: #{tpu_custom_call.1} parent=1 // pred_check_branch
      %97 = sbr.rel (0) target = $region65
    $region64: #{tpu_custom_call.1} parent=1 // pred_region
      _
    $region65: #{tpu_custom_call.1} parent=1 // pred_fallthru
      _
    // Predicated region
    $region66: #{tpu_custom_call.1} parent=1 // pred_check
      _
    $region67: #{tpu_custom_call.1} parent=1 // pred_check_branch
      %99 = sbr.rel (0) target = $region69
    $region68: #{tpu_custom_call.1} parent=1 // pred_region
      _
    $region69: #{tpu_custom_call.1} parent=1 // pred_fallthru
      _
    // Predicated region
    $region70: #{tpu_custom_call.1} parent=1 // pred_check
      _
    $region71: #{tpu_custom_call.1} parent=1 // pred_check_branch
      %101 = sbr.rel (0) target = $region73
    $region72: #{tpu_custom_call.1} parent=1 // pred_region
      %102 = dma.done [#allocation3], 256
    $region73: #{tpu_custom_call.1} parent=1 // pred_fallthru
      _
    // Predicated region
    $region74: #{tpu_custom_call.1} parent=1 // pred_check
      _
    $region75: #{tpu_custom_call.1} parent=1 // pred_check_branch
      %104 = sbr.rel (0) target = $region77
    $region76: #{tpu_custom_call.1} parent=1 // pred_region
      %105 = dma.done [#allocation6], 256
    $region77: #{tpu_custom_call.1} parent=1 // pred_fallthru
      _
    // Predicated region
    $region78: #{tpu_custom_call.1} parent=1 // pred_check
      _
    $region79: #{tpu_custom_call.1} parent=1 // pred_check_branch
      %107 = sbr.rel (0) target = $region81
    $region80: #{tpu_custom_call.1} parent=1 // pred_region
      %108 = dma.done [#allocation6], 256
    $region81: #{tpu_custom_call.1} parent=1 // pred_fallthru
      _
    // Predicated region
    $region82: #{tpu_custom_call.1} parent=1 // pred_check
      _
    $region83: #{tpu_custom_call.1} parent=1 // pred_check_branch
      %110 = sbr.rel (0) target = $region85
    $region84: #{tpu_custom_call.1} parent=1 // pred_region
      %111 = dma.done [#allocation9], 256
    $region85: #{tpu_custom_call.1} parent=1 // pred_fallthru
      _
    %v112 = vld [vmem:[#allocation2] sm:$0xff]
    %v113 = vld [vmem:[#allocation2 + $0x8] sm:$0xff]
    %v114 = vld [vmem:[#allocation5] sm:$0xff]
    %v115 = vld [vmem:[#allocation5 + $0x8] sm:$0xff]
    %v116 = vld [vmem:[#allocation7] sm:$0xff]
    %v117 = vld [vmem:[#allocation7 + $0x8] sm:$0xff]
    %v118 = vld [vmem:[#allocation8] sm:$0xff]
    %v119 = vld [vmem:[#allocation8 + $0x8] sm:$0xff]
    %v120 = vld [vmem:[%s6] sm:$0xff]
    %v121 = vld [vmem:[%s6 + $0x8] sm:$0xff]
    %v122 = vld [vmem:[%s6 + $0x10] sm:$0xff]
    %v123 = vld [vmem:[%s6 + $0x18] sm:$0xff]
    %vm124 = vcmask 261120
    %v126 = vsel %vm124, %v112, 0
    %v129 = vsel %vm124, %v113, 0
    %131 = vmatprep.subr.mxu0 0.0
    %132 = vmatpush1.msra.mxu0 0.0
    %133 = vmatprep.subr.mxu0 0.0
    %134 = vmatpush1.msra.mxu0 0.0
    %135 = vmatprep.subr.mxu0 0.0
    %136 = vmatpush1.msra.mxu0 0.0
    %137 = vmatprep.subr.mxu0 0.0
    %138 = vmatpush1.msra.mxu0 0.0
    %139 = vmatprep.subr.mxu0 0.0
    %140 = vmatpush1.msra.mxu0 0.0
    %141 = vmatprep.subr.mxu0 0.0
    %142 = vmatpush1.msra.mxu0 0.0
    %143 = vmatprep.subr.mxu0 0.0
    %144 = vmatpush1.msra.mxu0 0.0
    %145 = vmatprep.subr.mxu0 0.0
    %146 = vmatpush1.msra.mxu0 0.0
    %147 = vmatprep.subr.mxu0 0.0
    %148 = vmatpush1.msra.mxu0 0.0
    %149 = vmatprep.subr.mxu0 0.0
    %150 = vmatpush1.msra.mxu0 0.0
    %151 = vmatprep.subr.mxu0 0.0
    %152 = vmatpush1.msra.mxu0 0.0
    %153 = vmatprep.subr.mxu0 0.0
    %154 = vmatpush1.msra.mxu0 0.0
    %155 = vmatprep.subr.mxu0 0.0
    %156 = vmatpush1.msra.mxu0 %v123
    %157 = vmatprep.subr.mxu0 0.0
    %158 = vmatpush1.msra.mxu0 %v122
    %159 = vmatprep.subr.mxu0 0.0
    %160 = vmatpush1.msra.mxu0 %v121
    %161 = vmatprep.subr.mxu0 0.0
    %162 = vmatpush1.msra.mxu0 %v120
    %163 = vmatprep.subr.mxu0 0.0
    %164 = vmatpush2.msra.mxu0 0.0
    %165 = vmatprep.subr.mxu0 0.0
    %166 = vmatpush2.msra.mxu0 0.0
    %167 = vmatprep.subr.mxu0 0.0
    %168 = vmatpush2.msra.mxu0 0.0
    %169 = vmatprep.subr.mxu0 0.0
    %170 = vmatpush2.msra.mxu0 0.0
    %171 = vmatprep.subr.mxu0 0.0
    %172 = vmatpush2.msra.mxu0 0.0
    %173 = vmatprep.subr.mxu0 0.0
    %174 = vmatpush2.msra.mxu0 0.0
    %175 = vmatprep.subr.mxu0 0.0
    %176 = vmatpush2.msra.mxu0 0.0
    %177 = vmatprep.subr.mxu0 0.0
    %178 = vmatpush2.msra.mxu0 0.0
    %179 = vmatprep.subr.mxu0 0.0
    %180 = vmatpush2.msra.mxu0 0.0
    %181 = vmatprep.subr.mxu0 0.0
    %182 = vmatpush2.msra.mxu0 0.0
    %183 = vmatprep.subr.mxu0 0.0
    %184 = vmatpush2.msra.mxu0 0.0
    %185 = vmatprep.subr.mxu0 0.0
    %186 = vmatpush2.msra.mxu0 0.0
    %187 = vmatprep.subr.mxu0 0.0
    %188 = vmatpush2.msra.mxu0 0.0
    %189 = vmatprep.subr.mxu0 0.0
    %190 = vmatpush2.msra.mxu0 0.0
    %191 = vmatprep.subr.mxu0 0.0
    %192 = vmatpush2.msra.mxu0 0.0
    %193 = vmatprep.subr.mxu0 0.0
    %194 = vmatpush2.msra.mxu0 0.0
    %195 = vmatprep.mubr.f32.mxu0 0.0
    %196 = vmatmul.mubr.f32.gmra.mxu0 %v126
    %v197 = vpop.f32.mrf.mxu0
    %v198 = vadd.f32 0.0, %v197
    %v199 = vpop.f32.mrf.mxu0
    %200 = vmatprep.mubr.f32.mxu0 0.0
    %201 = vmatmul.mubr.f32.gmra.mxu0 %v129
    %v202 = vpop.f32.mrf.mxu0
    %v203 = vadd.f32 0.0, %v202
    %v204 = vpop.f32.mrf.mxu0
    %205 = vdwg.mxu0
    %v206 = vmul.f32 %v198, 0.17677669
    %v207 = vmul.f32 %v203, 0.17677669
    %v208 = vld [vmem:[%s5] sm:$0xff]
    %v209 = vld [vmem:[%s5 + $0x8] sm:$0xff]
    %v210 = vld [vmem:[%s5 + $0x10] sm:$0xff]
    %v211 = vld [vmem:[%s5 + $0x18] sm:$0xff]
    %v213 = vsel %vm124, %v114, 0
    %v216 = vsel %vm124, %v115, 0
    %218 = vmatprep.subr.mxu0 0.0
    %219 = vmatpush1.msra.mxu0 0.0
    %220 = vmatprep.subr.mxu0 0.0
    %221 = vmatpush1.msra.mxu0 0.0
    %222 = vmatprep.subr.mxu0 0.0
    %223 = vmatpush1.msra.mxu0 0.0
    %224 = vmatprep.subr.mxu0 0.0
    %225 = vmatpush1.msra.mxu0 0.0
    %226 = vmatprep.subr.mxu0 0.0
    %227 = vmatpush1.msra.mxu0 0.0
    %228 = vmatprep.subr.mxu0 0.0
    %229 = vmatpush1.msra.mxu0 0.0
    %230 = vmatprep.subr.mxu0 0.0
    %231 = vmatpush1.msra.mxu0 0.0
    %232 = vmatprep.subr.mxu0 0.0
    %233 = vmatpush1.msra.mxu0 0.0
    %234 = vmatprep.subr.mxu0 0.0
    %235 = vmatpush1.msra.mxu0 0.0
    %236 = vmatprep.subr.mxu0 0.0
    %237 = vmatpush1.msra.mxu0 0.0
    %238 = vmatprep.subr.mxu0 0.0
    %239 = vmatpush1.msra.mxu0 0.0
    %240 = vmatprep.subr.mxu0 0.0
    %241 = vmatpush1.msra.mxu0 0.0
    %242 = vmatprep.subr.mxu0 0.0
    %243 = vmatpush1.msra.mxu0 %v211
    %244 = vmatprep.subr.mxu0 0.0
    %245 = vmatpush1.msra.mxu0 %v210
    %246 = vmatprep.subr.mxu0 0.0
    %247 = vmatpush1.msra.mxu0 %v209
    %248 = vmatprep.subr.mxu0 0.0
    %249 = vmatpush1.msra.mxu0 %v208
    %250 = vmatprep.subr.mxu0 0.0
    %251 = vmatpush2.msra.mxu0 0.0
    %252 = vmatprep.subr.mxu0 0.0
    %253 = vmatpush2.msra.mxu0 0.0
    %254 = vmatprep.subr.mxu0 0.0
    %255 = vmatpush2.msra.mxu0 0.0
    %256 = vmatprep.subr.mxu0 0.0
    %257 = vmatpush2.msra.mxu0 0.0
    %258 = vmatprep.subr.mxu0 0.0
    %259 = vmatpush2.msra.mxu0 0.0
    %260 = vmatprep.subr.mxu0 0.0
    %261 = vmatpush2.msra.mxu0 0.0
    %262 = vmatprep.subr.mxu0 0.0
    %263 = vmatpush2.msra.mxu0 0.0
    %264 = vmatprep.subr.mxu0 0.0
    %265 = vmatpush2.msra.mxu0 0.0
    %266 = vmatprep.subr.mxu0 0.0
    %267 = vmatpush2.msra.mxu0 0.0
    %268 = vmatprep.subr.mxu0 0.0
    %269 = vmatpush2.msra.mxu0 0.0
    %270 = vmatprep.subr.mxu0 0.0
    %271 = vmatpush2.msra.mxu0 0.0
    %272 = vmatprep.subr.mxu0 0.0
    %273 = vmatpush2.msra.mxu0 0.0
    %274 = vmatprep.subr.mxu0 0.0
    %275 = vmatpush2.msra.mxu0 0.0
    %276 = vmatprep.subr.mxu0 0.0
    %277 = vmatpush2.msra.mxu0 0.0
    %278 = vmatprep.subr.mxu0 0.0
    %279 = vmatpush2.msra.mxu0 0.0
    %280 = vmatprep.subr.mxu0 0.0
    %281 = vmatpush2.msra.mxu0 0.0
    %282 = vmatprep.mubr.f32.mxu0 0.0
    %283 = vmatmul.mubr.f32.gmra.mxu0 %v213
    %v284 = vpop.f32.mrf.mxu0
    %v285 = vadd.f32 0.0, %v284
    %v286 = vpop.f32.mrf.mxu0
    %287 = vmatprep.mubr.f32.mxu0 0.0
    %288 = vmatmul.mubr.f32.gmra.mxu0 %v216
    %v289 = vpop.f32.mrf.mxu0
    %v290 = vadd.f32 0.0, %v289
    %v291 = vpop.f32.mrf.mxu0
    %292 = vdwg.mxu0
    %v293 = vld [vmem:[%s4] sm:$0xff]
    %v294 = vld [vmem:[%s4 + $0x8] sm:$0xff]
    %v295 = vld [vmem:[%s4 + $0x10] sm:$0xff]
    %v296 = vld [vmem:[%s4 + $0x18] sm:$0xff]
    %v298 = vsel %vm124, %v116, 0
    %v301 = vsel %vm124, %v117, 0
    %303 = vmatprep.subr.mxu0 0.0
    %304 = vmatpush1.msra.mxu0 0.0
    %305 = vmatprep.subr.mxu0 0.0
    %306 = vmatpush1.msra.mxu0 0.0
    %307 = vmatprep.subr.mxu0 0.0
    %308 = vmatpush1.msra.mxu0 0.0
    %309 = vmatprep.subr.mxu0 0.0
    %310 = vmatpush1.msra.mxu0 0.0
    %311 = vmatprep.subr.mxu0 0.0
    %312 = vmatpush1.msra.mxu0 0.0
    %313 = vmatprep.subr.mxu0 0.0
    %314 = vmatpush1.msra.mxu0 0.0
    %315 = vmatprep.subr.mxu0 0.0
    %316 = vmatpush1.msra.mxu0 0.0
    %317 = vmatprep.subr.mxu0 0.0
    %318 = vmatpush1.msra.mxu0 0.0
    %319 = vmatprep.subr.mxu0 0.0
    %320 = vmatpush1.msra.mxu0 0.0
    %321 = vmatprep.subr.mxu0 0.0
    %322 = vmatpush1.msra.mxu0 0.0
    %323 = vmatprep.subr.mxu0 0.0
    %324 = vmatpush1.msra.mxu0 0.0
    %325 = vmatprep.subr.mxu0 0.0
    %326 = vmatpush1.msra.mxu0 0.0
    %327 = vmatprep.subr.mxu0 0.0
    %328 = vmatpush1.msra.mxu0 %v296
    %329 = vmatprep.subr.mxu0 0.0
    %330 = vmatpush1.msra.mxu0 %v295
    %331 = vmatprep.subr.mxu0 0.0
    %332 = vmatpush1.msra.mxu0 %v294
    %333 = vmatprep.subr.mxu0 0.0
    %334 = vmatpush1.msra.mxu0 %v293
    %335 = vmatprep.subr.mxu0 0.0
    %336 = vmatpush2.msra.mxu0 0.0
    %337 = vmatprep.subr.mxu0 0.0
    %338 = vmatpush2.msra.mxu0 0.0
    %339 = vmatprep.subr.mxu0 0.0
    %340 = vmatpush2.msra.mxu0 0.0
    %341 = vmatprep.subr.mxu0 0.0
    %342 = vmatpush2.msra.mxu0 0.0
    %343 = vmatprep.subr.mxu0 0.0
    %344 = vmatpush2.msra.mxu0 0.0
    %345 = vmatprep.subr.mxu0 0.0
    %346 = vmatpush2.msra.mxu0 0.0
    %347 = vmatprep.subr.mxu0 0.0
    %348 = vmatpush2.msra.mxu0 0.0
    %349 = vmatprep.subr.mxu0 0.0
    %350 = vmatpush2.msra.mxu0 0.0
    %351 = vmatprep.subr.mxu0 0.0
    %352 = vmatpush2.msra.mxu0 0.0
    %353 = vmatprep.subr.mxu0 0.0
    %354 = vmatpush2.msra.mxu0 0.0
    %355 = vmatprep.subr.mxu0 0.0
    %356 = vmatpush2.msra.mxu0 0.0
    %357 = vmatprep.subr.mxu0 0.0
    %358 = vmatpush2.msra.mxu0 0.0
    %359 = vmatprep.subr.mxu0 0.0
    %360 = vmatpush2.msra.mxu0 0.0
    %361 = vmatprep.subr.mxu0 0.0
    %362 = vmatpush2.msra.mxu0 0.0
    %363 = vmatprep.subr.mxu0 0.0
    %364 = vmatpush2.msra.mxu0 0.0
    %365 = vmatprep.subr.mxu0 0.0
    %366 = vmatpush2.msra.mxu0 0.0
    %367 = vmatprep.mubr.f32.mxu0 0.0
    %368 = vmatmul.mubr.f32.gmra.mxu0 %v298
    %v369 = vpop.f32.mrf.mxu0
    %v370 = vadd.f32 0.0, %v369
    %v371 = vpop.f32.mrf.mxu0
    %372 = vmatprep.mubr.f32.mxu0 0.0
    %373 = vmatmul.mubr.f32.gmra.mxu0 %v301
    %v374 = vpop.f32.mrf.mxu0
    %v375 = vadd.f32 0.0, %v374
    %v376 = vpop.f32.mrf.mxu0
    %377 = vdwg.mxu0
    %v378 = vlaneseq
    %v379 = vand.u32 %v378, 127
    %vm380 = vcmp.ge.s32.totalorder %v379, 0
    %vm381 = vcmp.lt.s32.totalorder %v379, 8
    %vm382 = vmand %vm380, %vm381
    %v383 = vsel %vm382, 1.0, 0.0
    %v384 = vmul.f32 %v206, %v383
    %v385 = vmul.f32 %v207, %v383
    %v387 = vsel %vm124, %v384, 0
    %v390 = vsel %vm124, %v385, 0
    %v393 = vsel %vm124, %v285, 0
    %v396 = vsel %vm124, %v290, 0
    %398 = vmatprep.subr.mxu0 0.0
    %399 = vmatpush1.xpose.msra.mxu0 0.0
    %400 = vmatprep.subr.mxu0 0.0
    %401 = vmatpush1.xpose.msra.mxu0 0.0
    %402 = vmatprep.subr.mxu0 0.0
    %403 = vmatpush1.xpose.msra.mxu0 0.0
    %404 = vmatprep.subr.mxu0 0.0
    %405 = vmatpush1.xpose.msra.mxu0 0.0
    %406 = vmatprep.subr.mxu0 0.0
    %407 = vmatpush1.xpose.msra.mxu0 0.0
    %408 = vmatprep.subr.mxu0 0.0
    %409 = vmatpush1.xpose.msra.mxu0 0.0
    %410 = vmatprep.subr.mxu0 0.0
    %411 = vmatpush1.xpose.msra.mxu0 0.0
    %412 = vmatprep.subr.mxu0 0.0
    %413 = vmatpush1.xpose.msra.mxu0 0.0
    %414 = vmatprep.subr.mxu0 0.0
    %415 = vmatpush1.xpose.msra.mxu0 0.0
    %416 = vmatprep.subr.mxu0 0.0
    %417 = vmatpush1.xpose.msra.mxu0 0.0
    %418 = vmatprep.subr.mxu0 0.0
    %419 = vmatpush1.xpose.msra.mxu0 0.0
    %420 = vmatprep.subr.mxu0 0.0
    %421 = vmatpush1.xpose.msra.mxu0 0.0
    %422 = vmatprep.subr.mxu0 0.0
    %423 = vmatpush1.xpose.msra.mxu0 0.0
    %424 = vmatprep.subr.mxu0 0.0
    %425 = vmatpush1.xpose.msra.mxu0 0.0
    %426 = vmatprep.subr.mxu0 0.0
    %427 = vmatpush1.xpose.msra.mxu0 %v396
    %428 = vmatprep.subr.mxu0 0.0
    %429 = vmatpush1.xpose.msra.mxu0 %v393
    %430 = vmatprep.subr.mxu0 0.0
    %431 = vmatpush2.xpose.msra.mxu0 0.0
    %432 = vmatprep.subr.mxu0 0.0
    %433 = vmatpush2.xpose.msra.mxu0 0.0
    %434 = vmatprep.subr.mxu0 0.0
    %435 = vmatpush2.xpose.msra.mxu0 0.0
    %436 = vmatprep.subr.mxu0 0.0
    %437 = vmatpush2.xpose.msra.mxu0 0.0
    %438 = vmatprep.subr.mxu0 0.0
    %439 = vmatpush2.xpose.msra.mxu0 0.0
    %440 = vmatprep.subr.mxu0 0.0
    %441 = vmatpush2.xpose.msra.mxu0 0.0
    %442 = vmatprep.subr.mxu0 0.0
    %443 = vmatpush2.xpose.msra.mxu0 0.0
    %444 = vmatprep.subr.mxu0 0.0
    %445 = vmatpush2.xpose.msra.mxu0 0.0
    %446 = vmatprep.subr.mxu0 0.0
    %447 = vmatpush2.xpose.msra.mxu0 0.0
    %448 = vmatprep.subr.mxu0 0.0
    %449 = vmatpush2.xpose.msra.mxu0 0.0
    %450 = vmatprep.subr.mxu0 0.0
    %451 = vmatpush2.xpose.msra.mxu0 0.0
    %452 = vmatprep.subr.mxu0 0.0
    %453 = vmatpush2.xpose.msra.mxu0 0.0
    %454 = vmatprep.subr.mxu0 0.0
    %455 = vmatpush2.xpose.msra.mxu0 0.0
    %456 = vmatprep.subr.mxu0 0.0
    %457 = vmatpush2.xpose.msra.mxu0 0.0
    %458 = vmatprep.subr.mxu0 0.0
    %459 = vmatpush2.xpose.msra.mxu0 0.0
    %460 = vmatprep.subr.mxu0 0.0
    %461 = vmatpush2.xpose.msra.mxu0 0.0
    %462 = vmatprep.mubr.f32.mxu0 0.0
    %463 = vmatmul.mubr.f32.gmra.mxu0 %v387
    %v464 = vpop.f32.mrf.mxu0
    %v465 = vadd.f32 %v118, %v464
    %v466 = vpop.f32.mrf.mxu0
    %467 = vmatprep.mubr.f32.mxu0 0.0
    %468 = vmatmul.mubr.f32.gmra.mxu0 %v390
    %v469 = vpop.f32.mrf.mxu0
    %v470 = vadd.f32 %v119, %v469
    %v471 = vpop.f32.mrf.mxu0
    %472 = vdwg.mxu0
    %vm473 = vcmask 130048
    %v474 = vsel %vm473, %v465, -inf
    %475 = vmax.xlane.f32.xlu0 %v474
    %v476 = vpop.xlane.xlu0 %475
    %v477 = vsel %vm473, %v470, -inf
    %478 = vmax.xlane.f32.xlu0 %v477
    %v479 = vpop.xlane.xlu0 %478
    %v480 = vsub.f32 %v465, %v476
    %v481 = vsub.f32 %v470, %v479
    %v482 = vmul.f32 %v480, 1.442695
    %v483 = vpow.pop %v482
    %v484 = vmul.f32 %v481, 1.442695
    %v485 = vpow.pop %v484
    %v486 = vsel %vm473, %v483, 0.0
    %487 = vadd.xlane.f32.xlu0 %v486
    %v488 = vpop.xlane.xlu0 %487
    %v489 = vsel %vm473, %v485, 0.0
    %490 = vadd.xlane.f32.xlu0 %v489
    %v491 = vpop.xlane.xlu0 %490
    %v492 = vrcp.pop %v488
    %v493 = vrcp.pop %v491
    %v494 = vmul.f32 %v483, %v492
    %v495 = vmul.f32 %v485, %v493
    %v496 = vmul.f32 %v370, %v383
    %v497 = vmul.f32 %v375, %v383
    %vm498 = vcmp.ge.s32.totalorder %v379, 8
    %vm499 = vcmp.lt.s32.totalorder %v379, 16
    %vm500 = vmand %vm498, %vm499
    %v501 = vsel %vm500, 1.0, 0.0
    %v502 = vmul.f32 %v206, %v501
    %v503 = vmul.f32 %v207, %v501
    %v505 = vsel %vm124, %v502, 0
    %v508 = vsel %vm124, %v503, 0
    %510 = vmatprep.subr.mxu0 0.0
    %511 = vmatpush1.xpose.msra.mxu0 0.0
    %512 = vmatprep.subr.mxu0 0.0
    %513 = vmatpush1.xpose.msra.mxu0 0.0
    %514 = vmatprep.subr.mxu0 0.0
    %515 = vmatpush1.xpose.msra.mxu0 0.0
    %516 = vmatprep.subr.mxu0 0.0
    %517 = vmatpush1.xpose.msra.mxu0 0.0
    %518 = vmatprep.subr.mxu0 0.0
    %519 = vmatpush1.xpose.msra.mxu0 0.0
    %520 = vmatprep.subr.mxu0 0.0
    %521 = vmatpush1.xpose.msra.mxu0 0.0
    %522 = vmatprep.subr.mxu0 0.0
    %523 = vmatpush1.xpose.msra.mxu0 0.0
    %524 = vmatprep.subr.mxu0 0.0
    %525 = vmatpush1.xpose.msra.mxu0 0.0
    %526 = vmatprep.subr.mxu0 0.0
    %527 = vmatpush1.xpose.msra.mxu0 0.0
    %528 = vmatprep.subr.mxu0 0.0
    %529 = vmatpush1.xpose.msra.mxu0 0.0
    %530 = vmatprep.subr.mxu0 0.0
    %531 = vmatpush1.xpose.msra.mxu0 0.0
    %532 = vmatprep.subr.mxu0 0.0
    %533 = vmatpush1.xpose.msra.mxu0 0.0
    %534 = vmatprep.subr.mxu0 0.0
    %535 = vmatpush1.xpose.msra.mxu0 0.0
    %536 = vmatprep.subr.mxu0 0.0
    %537 = vmatpush1.xpose.msra.mxu0 0.0
    %538 = vmatprep.subr.mxu0 0.0
    %539 = vmatpush1.xpose.msra.mxu0 %v396
    %540 = vmatprep.subr.mxu0 0.0
    %541 = vmatpush1.xpose.msra.mxu0 %v393
    %542 = vmatprep.subr.mxu0 0.0
    %543 = vmatpush2.xpose.msra.mxu0 0.0
    %544 = vmatprep.subr.mxu0 0.0
    %545 = vmatpush2.xpose.msra.mxu0 0.0
    %546 = vmatprep.subr.mxu0 0.0
    %547 = vmatpush2.xpose.msra.mxu0 0.0
    %548 = vmatprep.subr.mxu0 0.0
    %549 = vmatpush2.xpose.msra.mxu0 0.0
    %550 = vmatprep.subr.mxu0 0.0
    %551 = vmatpush2.xpose.msra.mxu0 0.0
    %552 = vmatprep.subr.mxu0 0.0
    %553 = vmatpush2.xpose.msra.mxu0 0.0
    %554 = vmatprep.subr.mxu0 0.0
    %555 = vmatpush2.xpose.msra.mxu0 0.0
    %556 = vmatprep.subr.mxu0 0.0
    %557 = vmatpush2.xpose.msra.mxu0 0.0
    %558 = vmatprep.subr.mxu0 0.0
    %559 = vmatpush2.xpose.msra.mxu0 0.0
    %560 = vmatprep.subr.mxu0 0.0
    %561 = vmatpush2.xpose.msra.mxu0 0.0
    %562 = vmatprep.subr.mxu0 0.0
    %563 = vmatpush2.xpose.msra.mxu0 0.0
    %564 = vmatprep.subr.mxu0 0.0
    %565 = vmatpush2.xpose.msra.mxu0 0.0
    %566 = vmatprep.subr.mxu0 0.0
    %567 = vmatpush2.xpose.msra.mxu0 0.0
    %568 = vmatprep.subr.mxu0 0.0
    %569 = vmatpush2.xpose.msra.mxu0 0.0
    %570 = vmatprep.subr.mxu0 0.0
    %571 = vmatpush2.xpose.msra.mxu0 0.0
    %572 = vmatprep.subr.mxu0 0.0
    %573 = vmatpush2.xpose.msra.mxu0 0.0
    %574 = vmatprep.mubr.f32.mxu0 0.0
    %575 = vmatmul.mubr.f32.gmra.mxu0 %v505
    %v576 = vpop.f32.mrf.mxu0
    %v577 = vadd.f32 %v118, %v576
    %v578 = vpop.f32.mrf.mxu0
    %579 = vmatprep.mubr.f32.mxu0 0.0
    %580 = vmatmul.mubr.f32.gmra.mxu0 %v508
    %v581 = vpop.f32.mrf.mxu0
    %v582 = vadd.f32 %v119, %v581
    %v583 = vpop.f32.mrf.mxu0
    %584 = vdwg.mxu0
    %v585 = vsel %vm473, %v577, -inf
    %586 = vmax.xlane.f32.xlu0 %v585
    %v587 = vpop.xlane.xlu0 %586
    %v588 = vsel %vm473, %v582, -inf
    %589 = vmax.xlane.f32.xlu0 %v588
    %v590 = vpop.xlane.xlu0 %589
    %v591 = vsub.f32 %v577, %v587
    %v592 = vsub.f32 %v582, %v590
    %v593 = vmul.f32 %v591, 1.442695
    %v594 = vpow.pop %v593
    %v595 = vmul.f32 %v592, 1.442695
    %v596 = vpow.pop %v595
    %v597 = vsel %vm473, %v594, 0.0
    %598 = vadd.xlane.f32.xlu0 %v597
    %v599 = vpop.xlane.xlu0 %598
    %v600 = vsel %vm473, %v596, 0.0
    %601 = vadd.xlane.f32.xlu0 %v600
    %v602 = vpop.xlane.xlu0 %601
    %v603 = vrcp.pop %v599
    %v604 = vrcp.pop %v602
    %v605 = vmul.f32 %v594, %v603
    %v606 = vmul.f32 %v596, %v604
    %v607 = vmul.f32 %v370, %v501
    %v608 = vmul.f32 %v375, %v501
    %v610 = vsel %vm473, %v605, 0
    %v613 = vsel %vm473, %v606, 0
    %615 = vmatprep.subr.mxu0 0.0
    %616 = vmatpush1.msra.mxu0 0.0
    %617 = vmatprep.subr.mxu0 0.0
    %618 = vmatpush1.msra.mxu0 0.0
    %619 = vmatprep.subr.mxu0 0.0
    %620 = vmatpush1.msra.mxu0 0.0
    %621 = vmatprep.subr.mxu0 0.0
    %622 = vmatpush1.msra.mxu0 0.0
    %623 = vmatprep.subr.mxu0 0.0
    %624 = vmatpush1.msra.mxu0 0.0
    %625 = vmatprep.subr.mxu0 0.0
    %626 = vmatpush1.msra.mxu0 0.0
    %627 = vmatprep.subr.mxu0 0.0
    %628 = vmatpush1.msra.mxu0 0.0
    %629 = vmatprep.subr.mxu0 0.0
    %630 = vmatpush1.msra.mxu0 0.0
    %631 = vmatprep.subr.mxu0 0.0
    %632 = vmatpush1.msra.mxu0 0.0
    %633 = vmatprep.subr.mxu0 0.0
    %634 = vmatpush1.msra.mxu0 0.0
    %635 = vmatprep.subr.mxu0 0.0
    %636 = vmatpush1.msra.mxu0 0.0
    %637 = vmatprep.subr.mxu0 0.0
    %638 = vmatpush1.msra.mxu0 0.0
    %639 = vmatprep.subr.mxu0 0.0
    %640 = vmatpush1.msra.mxu0 0.0
    %641 = vmatprep.subr.mxu0 0.0
    %642 = vmatpush1.msra.mxu0 0.0
    %643 = vmatprep.subr.mxu0 0.0
    %644 = vmatpush1.msra.mxu0 %v608
    %645 = vmatprep.subr.mxu0 0.0
    %646 = vmatpush1.msra.mxu0 %v607
    %647 = vmatprep.subr.mxu0 0.0
    %648 = vmatpush2.msra.mxu0 0.0
    %649 = vmatprep.subr.mxu0 0.0
    %650 = vmatpush2.msra.mxu0 0.0
    %651 = vmatprep.subr.mxu0 0.0
    %652 = vmatpush2.msra.mxu0 0.0
    %653 = vmatprep.subr.mxu0 0.0
    %654 = vmatpush2.msra.mxu0 0.0
    %655 = vmatprep.subr.mxu0 0.0
    %656 = vmatpush2.msra.mxu0 0.0
    %657 = vmatprep.subr.mxu0 0.0
    %658 = vmatpush2.msra.mxu0 0.0
    %659 = vmatprep.subr.mxu0 0.0
    %660 = vmatpush2.msra.mxu0 0.0
    %661 = vmatprep.subr.mxu0 0.0
    %662 = vmatpush2.msra.mxu0 0.0
    %663 = vmatprep.subr.mxu0 0.0
    %664 = vmatpush2.msra.mxu0 0.0
    %665 = vmatprep.subr.mxu0 0.0
    %666 = vmatpush2.msra.mxu0 0.0
    %667 = vmatprep.subr.mxu0 0.0
    %668 = vmatpush2.msra.mxu0 0.0
    %669 = vmatprep.subr.mxu0 0.0
    %670 = vmatpush2.msra.mxu0 0.0
    %671 = vmatprep.subr.mxu0 0.0
    %672 = vmatpush2.msra.mxu0 0.0
    %673 = vmatprep.subr.mxu0 0.0
    %674 = vmatpush2.msra.mxu0 0.0
    %675 = vmatprep.subr.mxu0 0.0
    %676 = vmatpush2.msra.mxu0 0.0
    %677 = vmatprep.subr.mxu0 0.0
    %678 = vmatpush2.msra.mxu0 0.0
    %679 = vmatprep.mubr.f32.mxu0 0.0
    %680 = vmatmul.mubr.f32.gmra.mxu0 %v610
    %v681 = vpop.f32.mrf.mxu0
    %v682 = vadd.f32 0.0, %v681
    %v683 = vpop.f32.mrf.mxu0
    %684 = vmatprep.mubr.f32.mxu0 0.0
    %685 = vmatmul.mubr.f32.gmra.mxu0 %v613
    %v686 = vpop.f32.mrf.mxu0
    %v687 = vadd.f32 0.0, %v686
    %v688 = vpop.f32.mrf.mxu0
    %689 = vdwg.mxu0
    %v691 = vsel %vm473, %v494, 0
    %v694 = vsel %vm473, %v495, 0
    %696 = vmatprep.subr.mxu0 0.0
    %697 = vmatpush1.msra.mxu0 0.0
    %698 = vmatprep.subr.mxu0 0.0
    %699 = vmatpush1.msra.mxu0 0.0
    %700 = vmatprep.subr.mxu0 0.0
    %701 = vmatpush1.msra.mxu0 0.0
    %702 = vmatprep.subr.mxu0 0.0
    %703 = vmatpush1.msra.mxu0 0.0
    %704 = vmatprep.subr.mxu0 0.0
    %705 = vmatpush1.msra.mxu0 0.0
    %706 = vmatprep.subr.mxu0 0.0
    %707 = vmatpush1.msra.mxu0 0.0
    %708 = vmatprep.subr.mxu0 0.0
    %709 = vmatpush1.msra.mxu0 0.0
    %710 = vmatprep.subr.mxu0 0.0
    %711 = vmatpush1.msra.mxu0 0.0
    %712 = vmatprep.subr.mxu0 0.0
    %713 = vmatpush1.msra.mxu0 0.0
    %714 = vmatprep.subr.mxu0 0.0
    %715 = vmatpush1.msra.mxu0 0.0
    %716 = vmatprep.subr.mxu0 0.0
    %717 = vmatpush1.msra.mxu0 0.0
    %718 = vmatprep.subr.mxu0 0.0
    %719 = vmatpush1.msra.mxu0 0.0
    %720 = vmatprep.subr.mxu0 0.0
    %721 = vmatpush1.msra.mxu0 0.0
    %722 = vmatprep.subr.mxu0 0.0
    %723 = vmatpush1.msra.mxu0 0.0
    %724 = vmatprep.subr.mxu0 0.0
    %725 = vmatpush1.msra.mxu0 %v497
    %726 = vmatprep.subr.mxu0 0.0
    %727 = vmatpush1.msra.mxu0 %v496
    %728 = vmatprep.subr.mxu0 0.0
    %729 = vmatpush2.msra.mxu0 0.0
    %730 = vmatprep.subr.mxu0 0.0
    %731 = vmatpush2.msra.mxu0 0.0
    %732 = vmatprep.subr.mxu0 0.0
    %733 = vmatpush2.msra.mxu0 0.0
    %734 = vmatprep.subr.mxu0 0.0
    %735 = vmatpush2.msra.mxu0 0.0
    %736 = vmatprep.subr.mxu0 0.0
    %737 = vmatpush2.msra.mxu0 0.0
    %738 = vmatprep.subr.mxu0 0.0
    %739 = vmatpush2.msra.mxu0 0.0
    %740 = vmatprep.subr.mxu0 0.0
    %741 = vmatpush2.msra.mxu0 0.0
    %742 = vmatprep.subr.mxu0 0.0
    %743 = vmatpush2.msra.mxu0 0.0
    %744 = vmatprep.subr.mxu0 0.0
    %745 = vmatpush2.msra.mxu0 0.0
    %746 = vmatprep.subr.mxu0 0.0
    %747 = vmatpush2.msra.mxu0 0.0
    %748 = vmatprep.subr.mxu0 0.0
    %749 = vmatpush2.msra.mxu0 0.0
    %750 = vmatprep.subr.mxu0 0.0
    %751 = vmatpush2.msra.mxu0 0.0
    %752 = vmatprep.subr.mxu0 0.0
    %753 = vmatpush2.msra.mxu0 0.0
    %754 = vmatprep.subr.mxu0 0.0
    %755 = vmatpush2.msra.mxu0 0.0
    %756 = vmatprep.subr.mxu0 0.0
    %757 = vmatpush2.msra.mxu0 0.0
    %758 = vmatprep.subr.mxu0 0.0
    %759 = vmatpush2.msra.mxu0 0.0
    %760 = vmatprep.mubr.f32.mxu0 0.0
    %761 = vmatmul.mubr.f32.gmra.mxu0 %v691
    %v762 = vpop.f32.mrf.mxu0
    %v763 = vadd.f32 %v682, %v762
    %v764 = vpop.f32.mrf.mxu0
    %765 = vmatprep.mubr.f32.mxu0 0.0
    %766 = vmatmul.mubr.f32.gmra.mxu0 %v694
    %v767 = vpop.f32.mrf.mxu0
    %v768 = vadd.f32 %v687, %v767
    %v769 = vpop.f32.mrf.mxu0
    %770 = vdwg.mxu0
    %vm771 = vcmp.ge.s32.totalorder %v379, 16
    %vm772 = vcmp.lt.s32.totalorder %v379, 24
    %vm773 = vmand %vm771, %vm772
    %v774 = vsel %vm773, 1.0, 0.0
    %v775 = vmul.f32 %v206, %v774
    %v776 = vmul.f32 %v207, %v774
    %v778 = vsel %vm124, %v775, 0
    %v781 = vsel %vm124, %v776, 0
    %783 = vmatprep.subr.mxu0 0.0
    %784 = vmatpush1.xpose.msra.mxu0 0.0
    %785 = vmatprep.subr.mxu0 0.0
    %786 = vmatpush1.xpose.msra.mxu0 0.0
    %787 = vmatprep.subr.mxu0 0.0
    %788 = vmatpush1.xpose.msra.mxu0 0.0
    %789 = vmatprep.subr.mxu0 0.0
    %790 = vmatpush1.xpose.msra.mxu0 0.0
    %791 = vmatprep.subr.mxu0 0.0
    %792 = vmatpush1.xpose.msra.mxu0 0.0
    %793 = vmatprep.subr.mxu0 0.0
    %794 = vmatpush1.xpose.msra.mxu0 0.0
    %795 = vmatprep.subr.mxu0 0.0
    %796 = vmatpush1.xpose.msra.mxu0 0.0
    %797 = vmatprep.subr.mxu0 0.0
    %798 = vmatpush1.xpose.msra.mxu0 0.0
    %799 = vmatprep.subr.mxu0 0.0
    %800 = vmatpush1.xpose.msra.mxu0 0.0
    %801 = vmatprep.subr.mxu0 0.0
    %802 = vmatpush1.xpose.msra.mxu0 0.0
    %803 = vmatprep.subr.mxu0 0.0
    %804 = vmatpush1.xpose.msra.mxu0 0.0
    %805 = vmatprep.subr.mxu0 0.0
    %806 = vmatpush1.xpose.msra.mxu0 0.0
    %807 = vmatprep.subr.mxu0 0.0
    %808 = vmatpush1.xpose.msra.mxu0 0.0
    %809 = vmatprep.subr.mxu0 0.0
    %810 = vmatpush1.xpose.msra.mxu0 0.0
    %811 = vmatprep.subr.mxu0 0.0
    %812 = vmatpush1.xpose.msra.mxu0 %v396
    %813 = vmatprep.subr.mxu0 0.0
    %814 = vmatpush1.xpose.msra.mxu0 %v393
    %815 = vmatprep.subr.mxu0 0.0
    %816 = vmatpush2.xpose.msra.mxu0 0.0
    %817 = vmatprep.subr.mxu0 0.0
    %818 = vmatpush2.xpose.msra.mxu0 0.0
    %819 = vmatprep.subr.mxu0 0.0
    %820 = vmatpush2.xpose.msra.mxu0 0.0
    %821 = vmatprep.subr.mxu0 0.0
    %822 = vmatpush2.xpose.msra.mxu0 0.0
    %823 = vmatprep.subr.mxu0 0.0
    %824 = vmatpush2.xpose.msra.mxu0 0.0
    %825 = vmatprep.subr.mxu0 0.0
    %826 = vmatpush2.xpose.msra.mxu0 0.0
    %827 = vmatprep.subr.mxu0 0.0
    %828 = vmatpush2.xpose.msra.mxu0 0.0
    %829 = vmatprep.subr.mxu0 0.0
    %830 = vmatpush2.xpose.msra.mxu0 0.0
    %831 = vmatprep.subr.mxu0 0.0
    %832 = vmatpush2.xpose.msra.mxu0 0.0
    %833 = vmatprep.subr.mxu0 0.0
    %834 = vmatpush2.xpose.msra.mxu0 0.0
    %835 = vmatprep.subr.mxu0 0.0
    %836 = vmatpush2.xpose.msra.mxu0 0.0
    %837 = vmatprep.subr.mxu0 0.0
    %838 = vmatpush2.xpose.msra.mxu0 0.0
    %839 = vmatprep.subr.mxu0 0.0
    %840 = vmatpush2.xpose.msra.mxu0 0.0
    %841 = vmatprep.subr.mxu0 0.0
    %842 = vmatpush2.xpose.msra.mxu0 0.0
    %843 = vmatprep.subr.mxu0 0.0
    %844 = vmatpush2.xpose.msra.mxu0 0.0
    %845 = vmatprep.subr.mxu0 0.0
    %846 = vmatpush2.xpose.msra.mxu0 0.0
    %847 = vmatprep.mubr.f32.mxu0 0.0
    %848 = vmatmul.mubr.f32.gmra.mxu0 %v778
    %v849 = vpop.f32.mrf.mxu0
    %v850 = vadd.f32 %v118, %v849
    %v851 = vpop.f32.mrf.mxu0
    %852 = vmatprep.mubr.f32.mxu0 0.0
    %853 = vmatmul.mubr.f32.gmra.mxu0 %v781
    %v854 = vpop.f32.mrf.mxu0
    %v855 = vadd.f32 %v119, %v854
    %v856 = vpop.f32.mrf.mxu0
    %857 = vdwg.mxu0
    %v858 = vsel %vm473, %v850, -inf
    %859 = vmax.xlane.f32.xlu0 %v858
    %v860 = vpop.xlane.xlu0 %859
    %v861 = vsel %vm473, %v855, -inf
    %862 = vmax.xlane.f32.xlu0 %v861
    %v863 = vpop.xlane.xlu0 %862
    %v864 = vsub.f32 %v850, %v860
    %v865 = vsub.f32 %v855, %v863
    %v866 = vmul.f32 %v864, 1.442695
    %v867 = vpow.pop %v866
    %v868 = vmul.f32 %v865, 1.442695
    %v869 = vpow.pop %v868
    %v870 = vsel %vm473, %v867, 0.0
    %871 = vadd.xlane.f32.xlu0 %v870
    %v872 = vpop.xlane.xlu0 %871
    %v873 = vsel %vm473, %v869, 0.0
    %874 = vadd.xlane.f32.xlu0 %v873
    %v875 = vpop.xlane.xlu0 %874
    %v876 = vrcp.pop %v872
    %v877 = vrcp.pop %v875
    %v878 = vmul.f32 %v867, %v876
    %v879 = vmul.f32 %v869, %v877
    %v880 = vmul.f32 %v370, %v774
    %v881 = vmul.f32 %v375, %v774
    %v883 = vsel %vm473, %v878, 0
    %v886 = vsel %vm473, %v879, 0
    %888 = vmatprep.subr.mxu0 0.0
    %889 = vmatpush1.msra.mxu0 0.0
    %890 = vmatprep.subr.mxu0 0.0
    %891 = vmatpush1.msra.mxu0 0.0
    %892 = vmatprep.subr.mxu0 0.0
    %893 = vmatpush1.msra.mxu0 0.0
    %894 = vmatprep.subr.mxu0 0.0
    %895 = vmatpush1.msra.mxu0 0.0
    %896 = vmatprep.subr.mxu0 0.0
    %897 = vmatpush1.msra.mxu0 0.0
    %898 = vmatprep.subr.mxu0 0.0
    %899 = vmatpush1.msra.mxu0 0.0
    %900 = vmatprep.subr.mxu0 0.0
    %901 = vmatpush1.msra.mxu0 0.0
    %902 = vmatprep.subr.mxu0 0.0
    %903 = vmatpush1.msra.mxu0 0.0
    %904 = vmatprep.subr.mxu0 0.0
    %905 = vmatpush1.msra.mxu0 0.0
    %906 = vmatprep.subr.mxu0 0.0
    %907 = vmatpush1.msra.mxu0 0.0
    %908 = vmatprep.subr.mxu0 0.0
    %909 = vmatpush1.msra.mxu0 0.0
    %910 = vmatprep.subr.mxu0 0.0
    %911 = vmatpush1.msra.mxu0 0.0
    %912 = vmatprep.subr.mxu0 0.0
    %913 = vmatpush1.msra.mxu0 0.0
    %914 = vmatprep.subr.mxu0 0.0
    %915 = vmatpush1.msra.mxu0 0.0
    %916 = vmatprep.subr.mxu0 0.0
    %917 = vmatpush1.msra.mxu0 %v881
    %918 = vmatprep.subr.mxu0 0.0
    %919 = vmatpush1.msra.mxu0 %v880
    %920 = vmatprep.subr.mxu0 0.0
    %921 = vmatpush2.msra.mxu0 0.0
    %922 = vmatprep.subr.mxu0 0.0
    %923 = vmatpush2.msra.mxu0 0.0
    %924 = vmatprep.subr.mxu0 0.0
    %925 = vmatpush2.msra.mxu0 0.0
    %926 = vmatprep.subr.mxu0 0.0
    %927 = vmatpush2.msra.mxu0 0.0
    %928 = vmatprep.subr.mxu0 0.0
    %929 = vmatpush2.msra.mxu0 0.0
    %930 = vmatprep.subr.mxu0 0.0
    %931 = vmatpush2.msra.mxu0 0.0
    %932 = vmatprep.subr.mxu0 0.0
    %933 = vmatpush2.msra.mxu0 0.0
    %934 = vmatprep.subr.mxu0 0.0
    %935 = vmatpush2.msra.mxu0 0.0
    %936 = vmatprep.subr.mxu0 0.0
    %937 = vmatpush2.msra.mxu0 0.0
    %938 = vmatprep.subr.mxu0 0.0
    %939 = vmatpush2.msra.mxu0 0.0
    %940 = vmatprep.subr.mxu0 0.0
    %941 = vmatpush2.msra.mxu0 0.0
    %942 = vmatprep.subr.mxu0 0.0
    %943 = vmatpush2.msra.mxu0 0.0
    %944 = vmatprep.subr.mxu0 0.0
    %945 = vmatpush2.msra.mxu0 0.0
    %946 = vmatprep.subr.mxu0 0.0
    %947 = vmatpush2.msra.mxu0 0.0
    %948 = vmatprep.subr.mxu0 0.0
    %949 = vmatpush2.msra.mxu0 0.0
    %950 = vmatprep.subr.mxu0 0.0
    %951 = vmatpush2.msra.mxu0 0.0
    %952 = vmatprep.mubr.f32.mxu0 0.0
    %953 = vmatmul.mubr.f32.gmra.mxu0 %v883
    %v954 = vpop.f32.mrf.mxu0
    %v955 = vadd.f32 0.0, %v954
    %v956 = vpop.f32.mrf.mxu0
    %957 = vmatprep.mubr.f32.mxu0 0.0
    %958 = vmatmul.mubr.f32.gmra.mxu0 %v886
    %v959 = vpop.f32.mrf.mxu0
    %v960 = vadd.f32 0.0, %v959
    %v961 = vpop.f32.mrf.mxu0
    %962 = vdwg.mxu0
    %v963 = vadd.f32 %v763, %v955
    %v964 = vadd.f32 %v768, %v960
    %vm965 = vcmp.ge.s32.totalorder %v379, 24
    %vm966 = vcmp.lt.s32.totalorder %v379, 32
    %vm967 = vmand %vm965, %vm966
    %v968 = vsel %vm967, 1.0, 0.0
    %v969 = vmul.f32 %v206, %v968
    %v970 = vmul.f32 %v207, %v968
    %v972 = vsel %vm124, %v969, 0
    %v975 = vsel %vm124, %v970, 0
    %977 = vmatprep.subr.mxu0 0.0
    %978 = vmatpush1.xpose.msra.mxu0 0.0
    %979 = vmatprep.subr.mxu0 0.0
    %980 = vmatpush1.xpose.msra.mxu0 0.0
    %981 = vmatprep.subr.mxu0 0.0
    %982 = vmatpush1.xpose.msra.mxu0 0.0
    %983 = vmatprep.subr.mxu0 0.0
    %984 = vmatpush1.xpose.msra.mxu0 0.0
    %985 = vmatprep.subr.mxu0 0.0
    %986 = vmatpush1.xpose.msra.mxu0 0.0
    %987 = vmatprep.subr.mxu0 0.0
    %988 = vmatpush1.xpose.msra.mxu0 0.0
    %989 = vmatprep.subr.mxu0 0.0
    %990 = vmatpush1.xpose.msra.mxu0 0.0
    %991 = vmatprep.subr.mxu0 0.0
    %992 = vmatpush1.xpose.msra.mxu0 0.0
    %993 = vmatprep.subr.mxu0 0.0
    %994 = vmatpush1.xpose.msra.mxu0 0.0
    %995 = vmatprep.subr.mxu0 0.0
    %996 = vmatpush1.xpose.msra.mxu0 0.0
    %997 = vmatprep.subr.mxu0 0.0
    %998 = vmatpush1.xpose.msra.mxu0 0.0
    %999 = vmatprep.subr.mxu0 0.0
    %1000 = vmatpush1.xpose.msra.mxu0 0.0
    %1001 = vmatprep.subr.mxu0 0.0
    %1002 = vmatpush1.xpose.msra.mxu0 0.0
    %1003 = vmatprep.subr.mxu0 0.0
    %1004 = vmatpush1.xpose.msra.mxu0 0.0
    %1005 = vmatprep.subr.mxu0 0.0
    %1006 = vmatpush1.xpose.msra.mxu0 %v396
    %1007 = vmatprep.subr.mxu0 0.0
    %1008 = vmatpush1.xpose.msra.mxu0 %v393
    %1009 = vmatprep.subr.mxu0 0.0
    %1010 = vmatpush2.xpose.msra.mxu0 0.0
    %1011 = vmatprep.subr.mxu0 0.0
    %1012 = vmatpush2.xpose.msra.mxu0 0.0
    %1013 = vmatprep.subr.mxu0 0.0
    %1014 = vmatpush2.xpose.msra.mxu0 0.0
    %1015 = vmatprep.subr.mxu0 0.0
    %1016 = vmatpush2.xpose.msra.mxu0 0.0
    %1017 = vmatprep.subr.mxu0 0.0
    %1018 = vmatpush2.xpose.msra.mxu0 0.0
    %1019 = vmatprep.subr.mxu0 0.0
    %1020 = vmatpush2.xpose.msra.mxu0 0.0
    %1021 = vmatprep.subr.mxu0 0.0
    %1022 = vmatpush2.xpose.msra.mxu0 0.0
    %1023 = vmatprep.subr.mxu0 0.0
    %1024 = vmatpush2.xpose.msra.mxu0 0.0
    %1025 = vmatprep.subr.mxu0 0.0
    %1026 = vmatpush2.xpose.msra.mxu0 0.0
    %1027 = vmatprep.subr.mxu0 0.0
    %1028 = vmatpush2.xpose.msra.mxu0 0.0
    %1029 = vmatprep.subr.mxu0 0.0
    %1030 = vmatpush2.xpose.msra.mxu0 0.0
    %1031 = vmatprep.subr.mxu0 0.0
    %1032 = vmatpush2.xpose.msra.mxu0 0.0
    %1033 = vmatprep.subr.mxu0 0.0
    %1034 = vmatpush2.xpose.msra.mxu0 0.0
    %1035 = vmatprep.subr.mxu0 0.0
    %1036 = vmatpush2.xpose.msra.mxu0 0.0
    %1037 = vmatprep.subr.mxu0 0.0
    %1038 = vmatpush2.xpose.msra.mxu0 0.0
    %1039 = vmatprep.subr.mxu0 0.0
    %1040 = vmatpush2.xpose.msra.mxu0 0.0
    %1041 = vmatprep.mubr.f32.mxu0 0.0
    %1042 = vmatmul.mubr.f32.gmra.mxu0 %v972
    %v1043 = vpop.f32.mrf.mxu0
    %v1044 = vadd.f32 %v118, %v1043
    %v1045 = vpop.f32.mrf.mxu0
    %1046 = vmatprep.mubr.f32.mxu0 0.0
    %1047 = vmatmul.mubr.f32.gmra.mxu0 %v975
    %v1048 = vpop.f32.mrf.mxu0
    %v1049 = vadd.f32 %v119, %v1048
    %v1050 = vpop.f32.mrf.mxu0
    %1051 = vdwg.mxu0
    %v1052 = vsel %vm473, %v1044, -inf
    %1053 = vmax.xlane.f32.xlu0 %v1052
    %v1054 = vpop.xlane.xlu0 %1053
    %v1055 = vsel %vm473, %v1049, -inf
    %1056 = vmax.xlane.f32.xlu0 %v1055
    %v1057 = vpop.xlane.xlu0 %1056
    %v1058 = vsub.f32 %v1044, %v1054
    %v1059 = vsub.f32 %v1049, %v1057
    %v1060 = vmul.f32 %v1058, 1.442695
    %v1061 = vpow.pop %v1060
    %v1062 = vmul.f32 %v1059, 1.442695
    %v1063 = vpow.pop %v1062
    %v1064 = vsel %vm473, %v1061, 0.0
    %1065 = vadd.xlane.f32.xlu0 %v1064
    %v1066 = vpop.xlane.xlu0 %1065
    %v1067 = vsel %vm473, %v1063, 0.0
    %1068 = vadd.xlane.f32.xlu0 %v1067
    %v1069 = vpop.xlane.xlu0 %1068
    %v1070 = vrcp.pop %v1066
    %v1071 = vrcp.pop %v1069
    %v1072 = vmul.f32 %v1061, %v1070
    %v1073 = vmul.f32 %v1063, %v1071
    %v1074 = vmul.f32 %v370, %v968
    %v1075 = vmul.f32 %v375, %v968
    %v1077 = vsel %vm473, %v1072, 0
    %v1080 = vsel %vm473, %v1073, 0
    %1082 = vmatprep.subr.mxu0 0.0
    %1083 = vmatpush1.msra.mxu0 0.0
    %1084 = vmatprep.subr.mxu0 0.0
    %1085 = vmatpush1.msra.mxu0 0.0
    %1086 = vmatprep.subr.mxu0 0.0
    %1087 = vmatpush1.msra.mxu0 0.0
    %1088 = vmatprep.subr.mxu0 0.0
    %1089 = vmatpush1.msra.mxu0 0.0
    %1090 = vmatprep.subr.mxu0 0.0
    %1091 = vmatpush1.msra.mxu0 0.0
    %1092 = vmatprep.subr.mxu0 0.0
    %1093 = vmatpush1.msra.mxu0 0.0
    %1094 = vmatprep.subr.mxu0 0.0
    %1095 = vmatpush1.msra.mxu0 0.0
    %1096 = vmatprep.subr.mxu0 0.0
    %1097 = vmatpush1.msra.mxu0 0.0
    %1098 = vmatprep.subr.mxu0 0.0
    %1099 = vmatpush1.msra.mxu0 0.0
    %1100 = vmatprep.subr.mxu0 0.0
    %1101 = vmatpush1.msra.mxu0 0.0
    %1102 = vmatprep.subr.mxu0 0.0
    %1103 = vmatpush1.msra.mxu0 0.0
    %1104 = vmatprep.subr.mxu0 0.0
    %1105 = vmatpush1.msra.mxu0 0.0
    %1106 = vmatprep.subr.mxu0 0.0
    %1107 = vmatpush1.msra.mxu0 0.0
    %1108 = vmatprep.subr.mxu0 0.0
    %1109 = vmatpush1.msra.mxu0 0.0
    %1110 = vmatprep.subr.mxu0 0.0
    %1111 = vmatpush1.msra.mxu0 %v1075
    %1112 = vmatprep.subr.mxu0 0.0
    %1113 = vmatpush1.msra.mxu0 %v1074
    %1114 = vmatprep.subr.mxu0 0.0
    %1115 = vmatpush2.msra.mxu0 0.0
    %1116 = vmatprep.subr.mxu0 0.0
    %1117 = vmatpush2.msra.mxu0 0.0
    %1118 = vmatprep.subr.mxu0 0.0
    %1119 = vmatpush2.msra.mxu0 0.0
    %1120 = vmatprep.subr.mxu0 0.0
    %1121 = vmatpush2.msra.mxu0 0.0
    %1122 = vmatprep.subr.mxu0 0.0
    %1123 = vmatpush2.msra.mxu0 0.0
    %1124 = vmatprep.subr.mxu0 0.0
    %1125 = vmatpush2.msra.mxu0 0.0
    %1126 = vmatprep.subr.mxu0 0.0
    %1127 = vmatpush2.msra.mxu0 0.0
    %1128 = vmatprep.subr.mxu0 0.0
    %1129 = vmatpush2.msra.mxu0 0.0
    %1130 = vmatprep.subr.mxu0 0.0
    %1131 = vmatpush2.msra.mxu0 0.0
    %1132 = vmatprep.subr.mxu0 0.0
    %1133 = vmatpush2.msra.mxu0 0.0
    %1134 = vmatprep.subr.mxu0 0.0
    %1135 = vmatpush2.msra.mxu0 0.0
    %1136 = vmatprep.subr.mxu0 0.0
    %1137 = vmatpush2.msra.mxu0 0.0
    %1138 = vmatprep.subr.mxu0 0.0
    %1139 = vmatpush2.msra.mxu0 0.0
    %1140 = vmatprep.subr.mxu0 0.0
    %1141 = vmatpush2.msra.mxu0 0.0
    %1142 = vmatprep.subr.mxu0 0.0
    %1143 = vmatpush2.msra.mxu0 0.0
    %1144 = vmatprep.subr.mxu0 0.0
    %1145 = vmatpush2.msra.mxu0 0.0
    %1146 = vmatprep.mubr.f32.mxu0 0.0
    %1147 = vmatmul.mubr.f32.gmra.mxu0 %v1077
    %v1148 = vpop.f32.mrf.mxu0
    %v1149 = vadd.f32 0.0, %v1148
    %v1150 = vpop.f32.mrf.mxu0
    %1151 = vmatprep.mubr.f32.mxu0 0.0
    %1152 = vmatmul.mubr.f32.gmra.mxu0 %v1080
    %v1153 = vpop.f32.mrf.mxu0
    %v1154 = vadd.f32 0.0, %v1153
    %v1155 = vpop.f32.mrf.mxu0
    %1156 = vdwg.mxu0
    %v1157 = vadd.f32 %v963, %v1149
    %v1158 = vadd.f32 %v964, %v1154
    %v1159 = vld [vmem:[%s7] sm:$0xff]
    %v1160 = vld [vmem:[%s7 + $0x8] sm:$0xff]
    %v1161 = vld [vmem:[%s7 + $0x10] sm:$0xff]
    %v1162 = vld [vmem:[%s7 + $0x18] sm:$0xff]
    %v1163 = vld [vmem:[%s8] sm:$0x1]
    %v1165 = vlaneseq
    %v1166 = vshrl.u32 %v1165, 7
    %v1167 = vsub.s32 0, %v1166
    %v1168 = vrot.slane %v1163, %v1167
    %v1171 = vsel %vm124, %v1157, 0
    %v1174 = vsel %vm124, %v1158, 0
    %1176 = vmatprep.subr.mxu0 0.0
    %1177 = vmatpush1.msra.mxu0 0.0
    %1178 = vmatprep.subr.mxu0 0.0
    %1179 = vmatpush1.msra.mxu0 0.0
    %1180 = vmatprep.subr.mxu0 0.0
    %1181 = vmatpush1.msra.mxu0 0.0
    %1182 = vmatprep.subr.mxu0 0.0
    %1183 = vmatpush1.msra.mxu0 0.0
    %1184 = vmatprep.subr.mxu0 0.0
    %1185 = vmatpush1.msra.mxu0 0.0
    %1186 = vmatprep.subr.mxu0 0.0
    %1187 = vmatpush1.msra.mxu0 0.0
    %1188 = vmatprep.subr.mxu0 0.0
    %1189 = vmatpush1.msra.mxu0 0.0
    %1190 = vmatprep.subr.mxu0 0.0
    %1191 = vmatpush1.msra.mxu0 0.0
    %1192 = vmatprep.subr.mxu0 0.0
    %1193 = vmatpush1.msra.mxu0 0.0
    %1194 = vmatprep.subr.mxu0 0.0
    %1195 = vmatpush1.msra.mxu0 0.0
    %1196 = vmatprep.subr.mxu0 0.0
    %1197 = vmatpush1.msra.mxu0 0.0
    %1198 = vmatprep.subr.mxu0 0.0
    %1199 = vmatpush1.msra.mxu0 0.0
    %1200 = vmatprep.subr.mxu0 0.0
    %1201 = vmatpush1.msra.mxu0 %v1162
    %1202 = vmatprep.subr.mxu0 0.0
    %1203 = vmatpush1.msra.mxu0 %v1161
    %1204 = vmatprep.subr.mxu0 0.0
    %1205 = vmatpush1.msra.mxu0 %v1160
    %1206 = vmatprep.subr.mxu0 0.0
    %1207 = vmatpush1.msra.mxu0 %v1159
    %1208 = vmatprep.subr.mxu0 0.0
    %1209 = vmatpush2.msra.mxu0 0.0
    %1210 = vmatprep.subr.mxu0 0.0
    %1211 = vmatpush2.msra.mxu0 0.0
    %1212 = vmatprep.subr.mxu0 0.0
    %1213 = vmatpush2.msra.mxu0 0.0
    %1214 = vmatprep.subr.mxu0 0.0
    %1215 = vmatpush2.msra.mxu0 0.0
    %1216 = vmatprep.subr.mxu0 0.0
    %1217 = vmatpush2.msra.mxu0 0.0
    %1218 = vmatprep.subr.mxu0 0.0
    %1219 = vmatpush2.msra.mxu0 0.0
    %1220 = vmatprep.subr.mxu0 0.0
    %1221 = vmatpush2.msra.mxu0 0.0
    %1222 = vmatprep.subr.mxu0 0.0
    %1223 = vmatpush2.msra.mxu0 0.0
    %1224 = vmatprep.subr.mxu0 0.0
    %1225 = vmatpush2.msra.mxu0 0.0
    %1226 = vmatprep.subr.mxu0 0.0
    %1227 = vmatpush2.msra.mxu0 0.0
    %1228 = vmatprep.subr.mxu0 0.0
    %1229 = vmatpush2.msra.mxu0 0.0
    %1230 = vmatprep.subr.mxu0 0.0
    %1231 = vmatpush2.msra.mxu0 0.0
    %1232 = vmatprep.subr.mxu0 0.0
    %1233 = vmatpush2.msra.mxu0 0.0
    %1234 = vmatprep.subr.mxu0 0.0
    %1235 = vmatpush2.msra.mxu0 0.0
    %1236 = vmatprep.subr.mxu0 0.0
    %1237 = vmatpush2.msra.mxu0 0.0
    %1238 = vmatprep.subr.mxu0 0.0
    %1239 = vmatpush2.msra.mxu0 0.0
    %1240 = vmatprep.mubr.f32.mxu0 0.0
    %1241 = vmatmul.mubr.f32.gmra.mxu0 %v1171
    %v1242 = vpop.f32.mrf.mxu0
    %v1243 = vadd.f32 %v1168, %v1242
    %v1244 = vpop.f32.mrf.mxu0
    %1245 = vmatprep.mubr.f32.mxu0 0.0
    %1246 = vmatmul.mubr.f32.gmra.mxu0 %v1174
    %v1247 = vpop.f32.mrf.mxu0
    %v1248 = vadd.f32 %v1168, %v1247
    %v1249 = vpop.f32.mrf.mxu0
    %1250 = vdwg.mxu0
    %v1251 = vadd.f32 %v1243, %v112
    %v1252 = vadd.f32 %v1248, %v113
    %v1253 = vld [vmem:[%s9] sm:$0x1]
    %v1254 = vld [vmem:[%s10] sm:$0x1]
    %v1255 = vsel %vm124, %v1251, 0.0
    %1256 = vadd.xlane.f32.xlu0 %v1255
    %v1257 = vpop.xlane.xlu0 %1256
    %v1258 = vsel %vm124, %v1252, 0.0
    %1259 = vadd.xlane.f32.xlu0 %v1258
    %v1260 = vpop.xlane.xlu0 %1259
    %v1261 = vrcp.pop 32.0
    %v1262 = vmul.f32 %v1257, %v1261
    %v1263 = vmul.f32 %v1260, %v1261
    %v1264 = vsub.f32 %v1251, %v1262
    %v1265 = vsub.f32 %v1252, %v1263
    %v1266 = vmul.f32 %v1264, %v1264
    %v1267 = vmul.f32 %v1265, %v1265
    %v1268 = vsel %vm124, %v1266, 0.0
    %1269 = vadd.xlane.f32.xlu0 %v1268
    %v1270 = vpop.xlane.xlu0 %1269
    %v1271 = vsel %vm124, %v1267, 0.0
    %1272 = vadd.xlane.f32.xlu0 %v1271
    %v1273 = vpop.xlane.xlu0 %1272
    %v1274 = vmul.f32 %v1270, %v1261
    %v1275 = vmul.f32 %v1273, %v1261
    %v1276 = vadd.f32 %v1274, 1e-05
    %v1277 = vadd.f32 %v1275, 1e-05
    %v1278 = vrsqrt.pop %v1276
    %v1279 = vrsqrt.pop %v1277
    %v1280 = vmul.f32 %v1264, %v1278
    %v1281 = vmul.f32 %v1265, %v1279
    %v1283 = vlaneseq
    %v1284 = vshrl.u32 %v1283, 7
    %v1285 = vsub.s32 0, %v1284
    %v1286 = vrot.slane %v1253, %v1285
    %v1288 = vmul.f32 %v1280, %v1286
    %v1289 = vmul.f32 %v1281, %v1286
    %v1291 = vlaneseq
    %v1292 = vshrl.u32 %v1291, 7
    %v1293 = vsub.s32 0, %v1292
    %v1294 = vrot.slane %v1254, %v1293
    %v1296 = vadd.f32 %v1288, %v1294
    %v1297 = vadd.f32 %v1289, %v1294
    %v1298 = vld [vmem:[%s11] sm:$0xff]
    %v1299 = vld [vmem:[%s11 + $0x8] sm:$0xff]
    %v1300 = vld [vmem:[%s11 + $0x10] sm:$0xff]
    %v1301 = vld [vmem:[%s11 + $0x18] sm:$0xff]
    %v1302 = vld [vmem:[%s12] sm:$0x1]
    %v1304 = vlaneseq
    %v1305 = vshrl.u32 %v1304, 7
    %v1306 = vsub.s32 0, %v1305
    %v1307 = vrot.slane %v1302, %v1306
    %v1310 = vsel %vm124, %v1296, 0
    %v1313 = vsel %vm124, %v1297, 0
    %1315 = vmatprep.subr.mxu0 0.0
    %1316 = vmatpush1.msra.mxu0 0.0
    %1317 = vmatprep.subr.mxu0 0.0
    %1318 = vmatpush1.msra.mxu0 0.0
    %1319 = vmatprep.subr.mxu0 0.0
    %1320 = vmatpush1.msra.mxu0 0.0
    %1321 = vmatprep.subr.mxu0 0.0
    %1322 = vmatpush1.msra.mxu0 0.0
    %1323 = vmatprep.subr.mxu0 0.0
    %1324 = vmatpush1.msra.mxu0 0.0
    %1325 = vmatprep.subr.mxu0 0.0
    %1326 = vmatpush1.msra.mxu0 0.0
    %1327 = vmatprep.subr.mxu0 0.0
    %1328 = vmatpush1.msra.mxu0 0.0
    %1329 = vmatprep.subr.mxu0 0.0
    %1330 = vmatpush1.msra.mxu0 0.0
    %1331 = vmatprep.subr.mxu0 0.0
    %1332 = vmatpush1.msra.mxu0 0.0
    %1333 = vmatprep.subr.mxu0 0.0
    %1334 = vmatpush1.msra.mxu0 0.0
    %1335 = vmatprep.subr.mxu0 0.0
    %1336 = vmatpush1.msra.mxu0 0.0
    %1337 = vmatprep.subr.mxu0 0.0
    %1338 = vmatpush1.msra.mxu0 0.0
    %1339 = vmatprep.subr.mxu0 0.0
    %1340 = vmatpush1.msra.mxu0 %v1301
    %1341 = vmatprep.subr.mxu0 0.0
    %1342 = vmatpush1.msra.mxu0 %v1300
    %1343 = vmatprep.subr.mxu0 0.0
    %1344 = vmatpush1.msra.mxu0 %v1299
    %1345 = vmatprep.subr.mxu0 0.0
    %1346 = vmatpush1.msra.mxu0 %v1298
    %1347 = vmatprep.subr.mxu0 0.0
    %1348 = vmatpush2.msra.mxu0 0.0
    %1349 = vmatprep.subr.mxu0 0.0
    %1350 = vmatpush2.msra.mxu0 0.0
    %1351 = vmatprep.subr.mxu0 0.0
    %1352 = vmatpush2.msra.mxu0 0.0
    %1353 = vmatprep.subr.mxu0 0.0
    %1354 = vmatpush2.msra.mxu0 0.0
    %1355 = vmatprep.subr.mxu0 0.0
    %1356 = vmatpush2.msra.mxu0 0.0
    %1357 = vmatprep.subr.mxu0 0.0
    %1358 = vmatpush2.msra.mxu0 0.0
    %1359 = vmatprep.subr.mxu0 0.0
    %1360 = vmatpush2.msra.mxu0 0.0
    %1361 = vmatprep.subr.mxu0 0.0
    %1362 = vmatpush2.msra.mxu0 0.0
    %1363 = vmatprep.subr.mxu0 0.0
    %1364 = vmatpush2.msra.mxu0 0.0
    %1365 = vmatprep.subr.mxu0 0.0
    %1366 = vmatpush2.msra.mxu0 0.0
    %1367 = vmatprep.subr.mxu0 0.0
    %1368 = vmatpush2.msra.mxu0 0.0
    %1369 = vmatprep.subr.mxu0 0.0
    %1370 = vmatpush2.msra.mxu0 0.0
    %1371 = vmatprep.subr.mxu0 0.0
    %1372 = vmatpush2.msra.mxu0 0.0
    %1373 = vmatprep.subr.mxu0 0.0
    %1374 = vmatpush2.msra.mxu0 0.0
    %1375 = vmatprep.subr.mxu0 0.0
    %1376 = vmatpush2.msra.mxu0 0.0
    %1377 = vmatprep.subr.mxu0 0.0
    %1378 = vmatpush2.msra.mxu0 0.0
    %1379 = vmatprep.mubr.f32.mxu0 0.0
    %1380 = vmatmul.mubr.f32.gmra.mxu0 %v1310
    %v1381 = vpop.f32.mrf.mxu0
    %v1382 = vadd.f32 %v1307, %v1381
    %v1383 = vpop.f32.mrf.mxu0
    %1384 = vmatprep.mubr.f32.mxu0 0.0
    %1385 = vmatmul.mubr.f32.gmra.mxu0 %v1313
    %v1386 = vpop.f32.mrf.mxu0
    %v1387 = vadd.f32 %v1307, %v1386
    %v1388 = vpop.f32.mrf.mxu0
    %1389 = vdwg.mxu0
    %v1390 = vmax.f32 %v1382, 0.0
    %v1391 = vmax.f32 %v1387, 0.0
    %v1392 = vld [vmem:[%s13] sm:$0xff]
    %v1393 = vld [vmem:[%s13 + $0x8] sm:$0xff]
    %v1394 = vld [vmem:[%s13 + $0x10] sm:$0xff]
    %v1395 = vld [vmem:[%s13 + $0x18] sm:$0xff]
    %v1396 = vld [vmem:[%s13 + $0x20] sm:$0xff]
    %v1397 = vld [vmem:[%s13 + $0x28] sm:$0xff]
    %v1398 = vld [vmem:[%s13 + $0x30] sm:$0xff]
    %v1399 = vld [vmem:[%s13 + $0x38] sm:$0xff]
    %v1400 = vld [vmem:[%s13 + $0x40] sm:$0xff]
    %v1401 = vld [vmem:[%s13 + $0x48] sm:$0xff]
    %v1402 = vld [vmem:[%s13 + $0x50] sm:$0xff]
    %v1403 = vld [vmem:[%s13 + $0x58] sm:$0xff]
    %v1404 = vld [vmem:[%s13 + $0x60] sm:$0xff]
    %v1405 = vld [vmem:[%s13 + $0x68] sm:$0xff]
    %v1406 = vld [vmem:[%s13 + $0x70] sm:$0xff]
    %v1407 = vld [vmem:[%s13 + $0x78] sm:$0xff]
    %v1408 = vld [vmem:[%s14] sm:$0x1]
    %v1410 = vlaneseq
    %v1411 = vshrl.u32 %v1410, 7
    %v1412 = vsub.s32 0, %v1411
    %v1413 = vrot.slane %v1408, %v1412
    %1415 = vmatprep.subr.mxu0 0.0
    %1416 = vmatpush1.msra.mxu0 %v1407
    %1417 = vmatprep.subr.mxu0 0.0
    %1418 = vmatpush1.msra.mxu0 %v1406
    %1419 = vmatprep.subr.mxu0 0.0
    %1420 = vmatpush1.msra.mxu0 %v1405
    %1421 = vmatprep.subr.mxu0 0.0
    %1422 = vmatpush1.msra.mxu0 %v1404
    %1423 = vmatprep.subr.mxu0 0.0
    %1424 = vmatpush1.msra.mxu0 %v1403
    %1425 = vmatprep.subr.mxu0 0.0
    %1426 = vmatpush1.msra.mxu0 %v1402
    %1427 = vmatprep.subr.mxu0 0.0
    %1428 = vmatpush1.msra.mxu0 %v1401
    %1429 = vmatprep.subr.mxu0 0.0
    %1430 = vmatpush1.msra.mxu0 %v1400
    %1431 = vmatprep.subr.mxu0 0.0
    %1432 = vmatpush1.msra.mxu0 %v1399
    %1433 = vmatprep.subr.mxu0 0.0
    %1434 = vmatpush1.msra.mxu0 %v1398
    %1435 = vmatprep.subr.mxu0 0.0
    %1436 = vmatpush1.msra.mxu0 %v1397
    %1437 = vmatprep.subr.mxu0 0.0
    %1438 = vmatpush1.msra.mxu0 %v1396
    %1439 = vmatprep.subr.mxu0 0.0
    %1440 = vmatpush1.msra.mxu0 %v1395
    %1441 = vmatprep.subr.mxu0 0.0
    %1442 = vmatpush1.msra.mxu0 %v1394
    %1443 = vmatprep.subr.mxu0 0.0
    %1444 = vmatpush1.msra.mxu0 %v1393
    %1445 = vmatprep.subr.mxu0 0.0
    %1446 = vmatpush1.msra.mxu0 %v1392
    %1447 = vmatprep.subr.mxu0 0.0
    %1448 = vmatpush2.msra.mxu0 0.0
    %1449 = vmatprep.subr.mxu0 0.0
    %1450 = vmatpush2.msra.mxu0 0.0
    %1451 = vmatprep.subr.mxu0 0.0
    %1452 = vmatpush2.msra.mxu0 0.0
    %1453 = vmatprep.subr.mxu0 0.0
    %1454 = vmatpush2.msra.mxu0 0.0
    %1455 = vmatprep.subr.mxu0 0.0
    %1456 = vmatpush2.msra.mxu0 0.0
    %1457 = vmatprep.subr.mxu0 0.0
    %1458 = vmatpush2.msra.mxu0 0.0
    %1459 = vmatprep.subr.mxu0 0.0
    %1460 = vmatpush2.msra.mxu0 0.0
    %1461 = vmatprep.subr.mxu0 0.0
    %1462 = vmatpush2.msra.mxu0 0.0
    %1463 = vmatprep.subr.mxu0 0.0
    %1464 = vmatpush2.msra.mxu0 0.0
    %1465 = vmatprep.subr.mxu0 0.0
    %1466 = vmatpush2.msra.mxu0 0.0
    %1467 = vmatprep.subr.mxu0 0.0
    %1468 = vmatpush2.msra.mxu0 0.0
    %1469 = vmatprep.subr.mxu0 0.0
    %1470 = vmatpush2.msra.mxu0 0.0
    %1471 = vmatprep.subr.mxu0 0.0
    %1472 = vmatpush2.msra.mxu0 0.0
    %1473 = vmatprep.subr.mxu0 0.0
    %1474 = vmatpush2.msra.mxu0 0.0
    %1475 = vmatprep.subr.mxu0 0.0
    %1476 = vmatpush2.msra.mxu0 0.0
    %1477 = vmatprep.subr.mxu0 0.0
    %1478 = vmatpush2.msra.mxu0 0.0
    %1479 = vmatprep.mubr.f32.mxu0 0.0
    %1480 = vmatmul.mubr.f32.gmra.mxu0 %v1390
    %v1481 = vpop.f32.mrf.mxu0
    %v1482 = vadd.f32 %v1413, %v1481
    %v1483 = vpop.f32.mrf.mxu0
    %1484 = vmatprep.mubr.f32.mxu0 0.0
    %1485 = vmatmul.mubr.f32.gmra.mxu0 %v1391
    %v1486 = vpop.f32.mrf.mxu0
    %v1487 = vadd.f32 %v1413, %v1486
    %v1488 = vpop.f32.mrf.mxu0
    %1489 = vdwg.mxu0
    %v1490 = vadd.f32 %v1482, %v1296
    %v1491 = vadd.f32 %v1487, %v1297
    %v1492 = vld [vmem:[%s15] sm:$0x1]
    %v1493 = vld [vmem:[%s16] sm:$0x1]
    %v1494 = vsel %vm124, %v1490, 0.0
    %1495 = vadd.xlane.f32.xlu0 %v1494
    %v1496 = vpop.xlane.xlu0 %1495
    %v1497 = vsel %vm124, %v1491, 0.0
    %1498 = vadd.xlane.f32.xlu0 %v1497
    %v1499 = vpop.xlane.xlu0 %1498
    %v1500 = vmul.f32 %v1496, %v1261
    %v1501 = vmul.f32 %v1499, %v1261
    %v1502 = vsub.f32 %v1490, %v1500
    %v1503 = vsub.f32 %v1491, %v1501
    %v1504 = vmul.f32 %v1502, %v1502
    %v1505 = vmul.f32 %v1503, %v1503
    %v1506 = vsel %vm124, %v1504, 0.0
    %1507 = vadd.xlane.f32.xlu0 %v1506
    %v1508 = vpop.xlane.xlu0 %1507
    %v1509 = vsel %vm124, %v1505, 0.0
    %1510 = vadd.xlane.f32.xlu0 %v1509
    %v1511 = vpop.xlane.xlu0 %1510
    %v1512 = vmul.f32 %v1508, %v1261
    %v1513 = vmul.f32 %v1511, %v1261
    %v1514 = vadd.f32 %v1512, 1e-05
    %v1515 = vadd.f32 %v1513, 1e-05
    %v1516 = vrsqrt.pop %v1514
    %v1517 = vrsqrt.pop %v1515
    %v1518 = vmul.f32 %v1502, %v1516
    %v1519 = vmul.f32 %v1503, %v1517
    %v1521 = vlaneseq
    %v1522 = vshrl.u32 %v1521, 7
    %v1523 = vsub.s32 0, %v1522
    %v1524 = vrot.slane %v1492, %v1523
    %v1526 = vmul.f32 %v1518, %v1524
    %v1527 = vmul.f32 %v1519, %v1524
    %v1529 = vlaneseq
    %v1530 = vshrl.u32 %v1529, 7
    %v1531 = vsub.s32 0, %v1530
    %v1532 = vrot.slane %v1493, %v1531
    %v1534 = vadd.f32 %v1526, %v1532
    %v1535 = vadd.f32 %v1527, %v1532
    %1536 = vst.msk [vmem:[#allocation10] sm:$0xff] %vm124, %v1534
    %1537 = vst.msk [vmem:[#allocation10 + $0x8] sm:$0xff] %vm124, %v1535
    // Predicated region
    $region86: #{tpu_custom_call.1} parent=1 // pred_check
      _
    $region87: #{tpu_custom_call.1} parent=1 // pred_check_branch
      %1539 = sbr.rel (0) target = $region89
    $region88: #{tpu_custom_call.1} parent=1 // pred_region
      %s1541 = ssub.s32 256, 256
      %1542 = vsyncadd [#allocation4], %s1541
      %s1543 = sshll.u32 [#allocation10], 4
      %s1544 = int_to_ptr.vmem [resolvable:$true] %s1543
      %1549 = dma.vmem_to_hbm [thread:$0]  %s1544, 256, %s17, [#allocation4], 128, 128, 8
    $region89: #{tpu_custom_call.1} parent=1 // pred_fallthru
      _
    // Predicated region
    $region90: #{tpu_custom_call.1} parent=1 // pred_check
      _
    $region91: #{tpu_custom_call.1} parent=1 // pred_check_branch
      %1551 = sbr.rel (0) target = $region93
    $region92: #{tpu_custom_call.1} parent=1 // pred_region
      %1552 = dma.done [#allocation4], 256
    $region93: #{tpu_custom_call.1} parent=1 // pred_fallthru
      _
    %1553 = vsyncpa [#allocation3], 1
    %1554 = vsyncpa [#allocation6], 1
    %1555 = vsyncpa [#allocation9], 1
    %1556 = vsyncpa [#allocation4], 1

</llo_original>
